<compile_context>
chip_gen: v7x
topology: tpu7x:2x2x1
jax: 0.10.0
libtpu: 0.0.40
codegen_flags: <defaults>
</compile_context>

<pallas_src>
import functools

import jax
import jax.numpy as jnp
from jax.experimental import pallas as pl
from jax.experimental.pallas import tpu as pltpu


# ----------------------------------------------------------------------------
# Packed-parameter layout (single (24, 56) f32 block, resident every step).
# Columns:
#   [ 0,  6)  W1' (24 x  6)      [51]  b1' (24)
#   [ 8, 32)  W2' (18 x 24)      [52]  b2' (18)
#   [32, 50)  W3' (12 x 18)      [53]  b3' (12)
#   [50]      W4^T (12)          [54]  b4  (1)
# (primes = sigmoid-fold already applied)
# ----------------------------------------------------------------------------
_PACK_SHAPE = (24, 56)


def prepack_params(params):
    """Fold sigmoid affine constants into W/b (exact algebra, done once) and
    pack everything into one small (24, 56) f32 array."""
    w1, b1 = params["w1"], params["b1"]          # (24, 6), (24, 1)
    w2, b2 = params["w2"], params["b2"]          # (18, 24), (18, 1)
    w3, b3 = params["w3"], params["b3"]          # (12, 18), (12, 1)
    w4, b4 = params["w4"], params["b4"]          # (1, 12),  (1, 1)

    # sigmoid(z) = 0.5*tanh(z/2) + 0.5  ==>  kernel computes bare tanh.
    w1h = 0.5 * w1
    b1h = 0.5 * b1
    w2h = 0.25 * w2
    b2h = 0.25 * jnp.sum(w2, axis=1, keepdims=True) + 0.5 * b2
    w3h = 0.5 * w3
    b3h = 0.5 * jnp.sum(w3, axis=1, keepdims=True) + b3

    pack = jnp.zeros(_PACK_SHAPE, jnp.float32)
    pack = pack.at[0:24, 0:6].set(w1h)
    pack = pack.at[0:18, 8:32].set(w2h)
    pack = pack.at[0:12, 32:50].set(w3h)
    pack = pack.at[0:12, 50:51].set(w4.T)        # stored as a column
    pack = pack.at[0:24, 51:52].set(b1h)
    pack = pack.at[0:18, 52:53].set(b2h)
    pack = pack.at[0:12, 53:54].set(b3h)
    pack = pack.at[0:1, 54:55].set(b4)
    return pack


# ----------------------------------------------------------------------------
# Kernel
# ----------------------------------------------------------------------------
def mlp_kernel(x_ref, wb_ref, o_ref, *, compute_dtype):
    f32 = jnp.float32
    prec = (jax.lax.Precision.HIGHEST if compute_dtype == jnp.float32
            else jax.lax.Precision.DEFAULT)

    pack = wb_ref[...]                                   # (24, 56) f32, resident
    w1 = pack[0:24, 0:6].astype(compute_dtype)           # (24, 6)
    w2 = pack[0:18, 8:32].astype(compute_dtype)          # (18, 24)
    w3 = pack[0:12, 32:50].astype(compute_dtype)         # (12, 18)
    w4 = pack[0:12, 50:51]                               # (12, 1)  f32, VPU path
    b1 = pack[0:24, 51:52]                               # (24, 1)  f32
    b2 = pack[0:18, 52:53]                               # (18, 1)
    b3 = pack[0:12, 53:54]                               # (12, 1)
    b4 = pack[0:1, 54:55]                                # (1, 1)

    x = x_ref[...].astype(compute_dtype)                 # (tb, 6), natural layout

    # Layer 1: (24,6) . (tb,6)^T -> (24, tb).  NT contraction keeps the small W
    # stationary and streams the batch on the lane/N side; the minor-dim-6
    # transpose rides the in-kernel XLU, not a separate XLA relayout pass.
    nt = (((1,), (1,)), ((), ()))
    h = jax.lax.dot_general(w1, x, dimension_numbers=nt,
                            precision=prec, preferred_element_type=f32) + b1
    h = jnp.tanh(h)                                      # sigmoid fold -> bare tanh

    # Layer 2: (18,24) @ (24,tb)
    h = jnp.dot(w2, h.astype(compute_dtype),
                precision=prec, preferred_element_type=f32) + b2
    h = jnp.tanh(h)

    # Layer 3: (12,18) @ (18,tb), ReLU
    h = jnp.dot(w3, h.astype(compute_dtype),
                precision=prec, preferred_element_type=f32) + b3
    h = jnp.maximum(h, 0.0)

    # Layer 4: single-row output -> 12-term weighted sublane sum on the VPU/XLU
    # instead of a padded MXU pass (frees one MXU latch + result-FIFO pops).
    o = jnp.sum(w4 * h, axis=0, keepdims=True) + b4      # (1, tb), lane-dense
    o_ref[...] = o.astype(o_ref.dtype)


# ----------------------------------------------------------------------------
# Wrapper
# ----------------------------------------------------------------------------
def _round_up(a, m):
    return (a + m - 1) // m * m


def _pick_tile(batch, max_tile, min_steps=8):
    """Batch tile: >= min_steps grid steps when the batch allows it (keeps both
    v7x TensorCores fed via the 'parallel' axis and amortizes pipeline ramp),
    never below 128 lanes, never above max_tile.  Tiny batches use one exact
    full block (block dims == array dims)."""
    if batch <= 128:
        return batch
    tb = _round_up(-(-batch // min_steps), 128)
    return max(128, min(_round_up(max_tile, 128), tb))


@functools.partial(jax.jit, static_argnames=("max_batch_tile", "compute_dtype"))
def mlp_forward(x, wb_pack, *, max_batch_tile=4096, compute_dtype=jnp.bfloat16):
    """x: (B, 6) float32 (natural layout).  wb_pack: output of prepack_params.
    Returns (B, 1) float32, matching MLPModel_A_Cu.forward."""
    B, d_in = x.shape
    if d_in != 6:
        raise ValueError("MLPModel_A_Cu expects 6 input features")

    tb = _pick_tile(B, max_batch_tile)
    grid = (pl.cdiv(B, tb),)          # ragged last block handled by Pallas

    out = pl.pallas_call(
        functools.partial(mlp_kernel, compute_dtype=compute_dtype),
        out_shape=jax.ShapeDtypeStruct((1, B), jnp.float32),
        grid=grid,
        in_specs=[
            # x stays (B, 6): no host-side pad/transpose.  6 == full dim, tb is
            # a multiple of 8 (or == B), so the (8,128) rule is satisfied.
            pl.BlockSpec((tb, 6), lambda i: (i, 0)),
            # Single packed weights+biases block, resident across all steps.
            pl.BlockSpec(_PACK_SHAPE, lambda i: (0, 0)),
        ],
        out_specs=pl.BlockSpec((1, tb), lambda i: (0, i)),   # lane-dense store
        compiler_params=pltpu.CompilerParams(
            dimension_semantics=("parallel",)),               # megacore / 2-TC
    )(x.astype(jnp.float32), wb_pack)

    return out.reshape(B, 1)          # (1,B)->(B,1): pure reshape, no relayout


# ----------------------------------------------------------------------------
# Reference / init / self-test
# ----------------------------------------------------------------------------
def init_params(key):
    """PyTorch nn.Linear default init: U(-1/sqrt(fan_in), +1/sqrt(fan_in)).
    W stored as (out, in), b as (out, 1)."""
    sizes = [(6, 24), (24, 18), (18, 12), (12, 1)]
    params = {}
    for idx, (fan_in, fan_out) in enumerate(sizes, start=1):
        key, kw, kb = jax.random.split(key, 3)
        bound = 1.0 / jnp.sqrt(float(fan_in))
        params[f"w{idx}"] = jax.random.uniform(
            kw, (fan_out, fan_in), jnp.float32, -bound, bound)
        params[f"b{idx}"] = jax.random.uniform(
            kb, (fan_out, 1), jnp.float32, -bound, bound)
    return params


def reference_forward(x, params):
    h = jax.nn.sigmoid(x @ params["w1"].T + params["b1"].T)
    h = jax.nn.sigmoid(h @ params["w2"].T + params["b2"].T)
    h = jnp.maximum(h @ params["w3"].T + params["b3"].T, 0.0)
    return h @ params["w4"].T + params["b4"].T


if __name__ == "__main__":
    key = jax.random.PRNGKey(0)
    kp, kx1, kx2 = jax.random.split(key, 3)
    params = init_params(kp)
    wb = prepack_params(params)

    # Small shape consistent with the module: (batch=16, features=6).
    B1 = 16
    x1 = jax.random.normal(kx1, (B1, 6), jnp.float32)
    ref1 = reference_forward(x1, params)

    # f32-operand path: tight check of the sigmoid-fold algebra + layout.
    out1_f32 = jax.block_until_ready(
        mlp_forward(x1, wb, compute_dtype=jnp.float32))
    assert out1_f32.shape == (B1, 1)
    assert jnp.allclose(out1_f32, ref1, atol=1e-3, rtol=1e-3), "f32 mismatch (B=16)"

    # Default bf16-operand / f32-accumulate MXU path (looser tolerance).
    out1_bf16 = jax.block_until_ready(mlp_forward(x1, wb))
    assert out1_bf16.shape == (B1, 1)
    assert jnp.allclose(out1_bf16, ref1, atol=2e-2, rtol=2e-2), "bf16 mismatch (B=16)"

    # Ragged batch spanning several grid steps (masked final block, multiple
    # tiles so the 'parallel' axis has real work to split).
    B2 = 1000
    x2 = jax.random.normal(kx2, (B2, 6), jnp.float32)
    ref2 = reference_forward(x2, params)

    out2_f32 = jax.block_until_ready(
        mlp_forward(x2, wb, max_batch_tile=256, compute_dtype=jnp.float32))
    assert out2_f32.shape == (B2, 1)
    assert jnp.allclose(out2_f32, ref2, atol=1e-3, rtol=1e-3), "f32 mismatch (B=1000)"

    out2_bf16 = jax.block_until_ready(mlp_forward(x2, wb))
    assert out2_bf16.shape == (B2, 1)
    assert jnp.allclose(out2_bf16, ref2, atol=2e-2, rtol=2e-2), "bf16 mismatch (B=1000)"

    print("KERNEL_OK")
</pallas_src>

<mosaic_0001>
module attributes {stable_mosaic.version = 11 : i64} {
  func.func @mlp_kernel(%arg0: i32, %arg1: memref<16x6xf32, #tpu.memory_space<vmem>>, %arg2: memref<24x56xf32, #tpu.memory_space<vmem>>, %arg3: memref<1x16xf32, #tpu.memory_space<vmem>>) attributes {dimension_semantics = [#tpu.dimension_semantics<parallel>], iteration_bounds = array<i64: 1>, scalar_prefetch = 0 : i64, scratch_operands = 0 : i64, tpu.core_type = #tpu.core_type<tc>, window_params = [{transform_indices = @transform_0, window_bounds = array<i64: 16, 6>}, {pipeline_mode = #tpu.pipeline_mode<synchronous>, transform_indices = @transform_1, window_bounds = array<i64: 24, 56>}, {transform_indices = @transform_2, window_bounds = array<i64: 1, 16>}]} {
    %c0 = arith.constant 0 : index
    %c0_0 = arith.constant 0 : index
    %0 = vector.load %arg2[%c0, %c0_0] : memref<24x56xf32, #tpu.memory_space<vmem>>, vector<24x56xf32>
    %1 = vector.extract_strided_slice %0 {offsets = [0, 0], sizes = [24, 6], strides = [1, 1]} : vector<24x56xf32> to vector<24x6xf32>
    %2 = vector.extract_strided_slice %0 {offsets = [0, 8], sizes = [18, 24], strides = [1, 1]} : vector<24x56xf32> to vector<18x24xf32>
    %3 = vector.extract_strided_slice %0 {offsets = [0, 32], sizes = [12, 18], strides = [1, 1]} : vector<24x56xf32> to vector<12x18xf32>
    %4 = vector.extract_strided_slice %0 {offsets = [0, 50], sizes = [12, 1], strides = [1, 1]} : vector<24x56xf32> to vector<12x1xf32>
    %5 = vector.extract_strided_slice %0 {offsets = [0, 51], sizes = [24, 1], strides = [1, 1]} : vector<24x56xf32> to vector<24x1xf32>
    %6 = vector.extract_strided_slice %0 {offsets = [0, 52], sizes = [18, 1], strides = [1, 1]} : vector<24x56xf32> to vector<18x1xf32>
    %7 = vector.extract_strided_slice %0 {offsets = [0, 53], sizes = [12, 1], strides = [1, 1]} : vector<24x56xf32> to vector<12x1xf32>
    %8 = vector.extract_strided_slice %0 {offsets = [0, 54], sizes = [1, 1], strides = [1, 1]} : vector<24x56xf32> to vector<1x1xf32>
    %c0_1 = arith.constant 0 : index
    %c0_2 = arith.constant 0 : index
    %9 = vector.load %arg1[%c0_1, %c0_2] : memref<16x6xf32, #tpu.memory_space<vmem>>, vector<16x6xf32>
    %cst = arith.constant dense<0.000000e+00> : vector<24x16xf32>
    %10 = tpu.matmul %1, %9, %cst {dimension_numbers = #tpu.dot_dimension_numbers<[1], [1], [0], [0], [0, 0, 1, 0], [], []>, precision = #tpu.contract_precision<fp32>} : vector<24x6xf32>, vector<16x6xf32>, vector<24x16xf32> -> vector<24x16xf32>
    %11 = vector.broadcast %5 : vector<24x1xf32> to vector<24x16xf32>
    %12 = arith.addf %10, %11 : vector<24x16xf32>
    %13 = math.tanh %12 : vector<24x16xf32>
    %cst_3 = arith.constant dense<0.000000e+00> : vector<18x16xf32>
    %14 = tpu.matmul %2, %13, %cst_3 {dimension_numbers = #tpu.dot_dimension_numbers<[1], [0], [0], [1], [0, 0, 1, 1], [], []>, precision = #tpu.contract_precision<fp32>} : vector<18x24xf32>, vector<24x16xf32>, vector<18x16xf32> -> vector<18x16xf32>
    %15 = vector.broadcast %6 : vector<18x1xf32> to vector<18x16xf32>
    %16 = arith.addf %14, %15 : vector<18x16xf32>
    %17 = math.tanh %16 : vector<18x16xf32>
    %cst_4 = arith.constant dense<0.000000e+00> : vector<12x16xf32>
    %18 = tpu.matmul %3, %17, %cst_4 {dimension_numbers = #tpu.dot_dimension_numbers<[1], [0], [0], [1], [0, 0, 1, 1], [], []>, precision = #tpu.contract_precision<fp32>} : vector<12x18xf32>, vector<18x16xf32>, vector<12x16xf32> -> vector<12x16xf32>
    %19 = vector.broadcast %7 : vector<12x1xf32> to vector<12x16xf32>
    %20 = arith.addf %18, %19 : vector<12x16xf32>
    %cst_5 = arith.constant 0.000000e+00 : f32
    %21 = vector.broadcast %cst_5 : f32 to vector<12x16xf32>
    %22 = arith.maximumf %20, %21 : vector<12x16xf32>
    %23 = vector.broadcast %4 : vector<12x1xf32> to vector<12x16xf32>
    %24 = arith.mulf %23, %22 : vector<12x16xf32>
    %cst_6 = arith.constant dense<0.000000e+00> : vector<16xf32>
    %25 = vector.multi_reduction <add>, %24, %cst_6 [0] : vector<12x16xf32> to vector<16xf32>
    %26 = vector.shape_cast %25 : vector<16xf32> to vector<1x16xf32>
    %27 = vector.broadcast %8 : vector<1x1xf32> to vector<1x16xf32>
    %28 = arith.addf %26, %27 : vector<1x16xf32>
    %c0_7 = arith.constant 0 : index
    %c0_8 = arith.constant 0 : index
    %29 = vector.load %arg3[%c0_7, %c0_8] : memref<1x16xf32, #tpu.memory_space<vmem>>, vector<1x16xf32>
    tpu.vector_store %arg3[%c0_7, %c0_8], %28 {strides = array<i32>} : memref<1x16xf32, #tpu.memory_space<vmem>>, vector<1x16xf32>,
    return
  }
  func.func @transform_0(%arg0: i32) -> (i32, i32) {
    %c0_i32 = arith.constant 0 : i32
    %c0_i32_0 = arith.constant 0 : i32
    return %arg0, %c0_i32 : i32, i32
  }
  func.func @transform_1(%arg0: i32) -> (i32, i32) {
    %c0_i32 = arith.constant 0 : i32
    %c0_i32_0 = arith.constant 0 : i32
    %c0_i32_1 = arith.constant 0 : i32
    return %c0_i32, %c0_i32_0 : i32, i32
  }
  func.func @transform_2(%arg0: i32) -> (i32, i32) {
    %c0_i32 = arith.constant 0 : i32
    %c0_i32_0 = arith.constant 0 : i32
    return %c0_i32, %arg0 : i32, i32
  }
}

</mosaic_0001>

<llo_original>
// kernel: mlp_forward.1
$region0: #{mlp_forward.1}
  #allocation0 [shape = 'u32[]', space=smem, size = 0x4, offset = 0x4, fixed_abs, tag = 'smem constant byte address 0x4 - core index']
  #allocation1 [shape = 'u32[144,128]{1,0:T(1,128)}', space=vmem, size = 0x12000, scoped, tag = 'internal scratch']
  %s0 = inlined_call_operand.vmem [shape: f32[16,6], index: 0, kind: input, shape index: {}]
  %s1 = inlined_call_operand.vmem [shape: f32[24,56], index: 1, kind: input, shape index: {}]
  %s2 = inlined_call_operand.hbm [shape: f32[1,16], index: 2, kind: output, shape index: {}]
  %s3 = sld [smem:[#allocation0]]
  $region18: #{mlp_forward.1} parent=0
    _
  %s5 = ssub.s32 1, %s3
  %s6 = scalar_select 0, %s5, %s3
  $region1: #{mlp_forward.1} parent=0
    #allocation2 [shape = 'u8[512]{0}', space=vmem, size = 0x400, scoped, tag = 'output window, operand 0, single buffered']
    #allocation3 [shape = 's32[1]{0}', space=sflag, size = 0x4, scoped, tag = 'scoped memory for mlp_forward.1']
    %7 = vsyncpa [#allocation3], 0
    // Predicated region
    $region2: #{mlp_forward.1} parent=1 // pred_check
      _
    $region3: #{mlp_forward.1} parent=1 // pred_check_branch
      %9 = sbr.rel (0) target = $region5
    $region4: #{mlp_forward.1} parent=1 // pred_region
      _
    $region5: #{mlp_forward.1} parent=1 // pred_fallthru
      _
    // Predicated region
    $region6: #{mlp_forward.1} parent=1 // pred_check
      _
    $region7: #{mlp_forward.1} parent=1 // pred_check_branch
      %11 = sbr.rel (0) target = $region9
    $region8: #{mlp_forward.1} parent=1 // pred_region
      _
    $region9: #{mlp_forward.1} parent=1 // pred_fallthru
      _
    %v12 = vld [vmem:[%s1] sm:$0xff]
    %v13 = vld [vmem:[%s1 + $0x8] sm:$0xff]
    %v14 = vld [vmem:[%s1 + $0x10] sm:$0xff]
    %v15 = vld [vmem:[%s0] sm:$0xff]
    %v16 = vld [vmem:[%s0 + $0x8] sm:$0xff]
    %18 = vset.pattern.permute.xlu0 51
    %19 = vperm.xlu0 %18, %v12
    %v20 = vpop.permute.xlu0 %19
    %23 = vset.pattern.permute.xlu0 51
    %24 = vperm.xlu0 %23, %v13
    %v25 = vpop.permute.xlu0 %24
    %28 = vset.pattern.permute.xlu0 51
    %29 = vperm.xlu0 %28, %v14
    %v30 = vpop.permute.xlu0 %29
    %vm32 = vcmask 48128
    %v33 = vsel %vm32, %v12, 0
    %v35 = vsel %vm32, %v13, 0
    %v37 = vsel %vm32, %v14, 0
    %v40 = vsel %vm32, %v15, 0
    %v43 = vsel %vm32, %v16, 0
    %45 = vmatprep.subr.mxu0 0.0
    %v46 = vand.u32 %v40, 4294901760
    %47 = vmatpush1.xpose.msra.mxu0 %v46
    %48 = vmatprep.subr.mxu0 0.0
    %v49 = vand.u32 %v43, 4294901760
    %50 = vmatpush1.xpose.msra.mxu0 %v49
    %51 = vmatprep.subr.mxu0 0.0
    %52 = vmatpush1.xpose.msra.mxu0 0.0
    %53 = vmatprep.subr.mxu0 0.0
    %54 = vmatpush1.xpose.msra.mxu0 0.0
    %55 = vmatprep.subr.mxu0 0.0
    %56 = vmatpush1.xpose.msra.mxu0 0.0
    %57 = vmatprep.subr.mxu0 0.0
    %58 = vmatpush1.xpose.msra.mxu0 0.0
    %59 = vmatprep.subr.mxu0 0.0
    %60 = vmatpush1.xpose.msra.mxu0 0.0
    %61 = vmatprep.subr.mxu0 0.0
    %62 = vmatpush1.xpose.msra.mxu0 0.0
    %63 = vmatprep.subr.mxu0 0.0
    %64 = vmatpush1.xpose.msra.mxu0 0.0
    %65 = vmatprep.subr.mxu0 0.0
    %66 = vmatpush1.xpose.msra.mxu0 0.0
    %67 = vmatprep.subr.mxu0 0.0
    %68 = vmatpush1.xpose.msra.mxu0 0.0
    %69 = vmatprep.subr.mxu0 0.0
    %70 = vmatpush1.xpose.msra.mxu0 0.0
    %71 = vmatprep.subr.mxu0 0.0
    %72 = vmatpush1.xpose.msra.mxu0 0.0
    %73 = vmatprep.subr.mxu0 0.0
    %74 = vmatpush1.xpose.msra.mxu0 0.0
    %75 = vmatprep.subr.mxu0 0.0
    %76 = vmatpush1.xpose.msra.mxu0 0.0
    %77 = vmatprep.subr.mxu0 0.0
    %78 = vmatpush1.xpose.msra.mxu0 0.0
    %79 = vmatprep.subr.mxu0 0.0
    %80 = vmatpush1.xpose.msra.mxu0 0.0
    %81 = vmatprep.subr.mxu0 0.0
    %82 = vmatpush1.xpose.msra.mxu0 0.0
    %83 = vmatprep.subr.mxu0 0.0
    %84 = vmatpush1.xpose.msra.mxu0 0.0
    %85 = vmatprep.subr.mxu0 0.0
    %86 = vmatpush1.xpose.msra.mxu0 0.0
    %87 = vmatprep.subr.mxu0 0.0
    %88 = vmatpush1.xpose.msra.mxu0 0.0
    %89 = vmatprep.subr.mxu0 0.0
    %90 = vmatpush1.xpose.msra.mxu0 0.0
    %91 = vmatprep.subr.mxu0 0.0
    %92 = vmatpush1.xpose.msra.mxu0 0.0
    %93 = vmatprep.subr.mxu0 0.0
    %94 = vmatpush1.xpose.msra.mxu0 0.0
    %95 = vmatprep.subr.mxu0 0.0
    %96 = vmatpush1.xpose.msra.mxu0 0.0
    %97 = vmatprep.subr.mxu0 0.0
    %98 = vmatpush1.xpose.msra.mxu0 0.0
    %99 = vmatprep.subr.mxu0 0.0
    %100 = vmatpush1.xpose.msra.mxu0 0.0
    %101 = vmatprep.subr.mxu0 0.0
    %102 = vmatpush1.xpose.msra.mxu0 0.0
    %103 = vmatprep.subr.mxu0 0.0
    %104 = vmatpush1.xpose.msra.mxu0 0.0
    %105 = vmatprep.subr.mxu0 0.0
    %106 = vmatpush1.xpose.msra.mxu0 0.0
    %107 = vmatprep.subr.mxu0 0.0
    %108 = vmatpush1.xpose.msra.mxu0 0.0
    %109 = vmatprep.subr.mxu0 0.0
    %110 = vmatpush1.xpose.msra.mxu0 0.0
    %111 = vmatprep.mubr.f32.mxu0 0.0
    %v112 = vand.u32 %v33, 4294901760
    %v113 = vsub.f32 %v33, %v112
    %v114 = vand.u32 %v113, 4294901760
    %v115 = vsub.f32 %v113, %v114
    %v116 = vand.u32 %v115, 4294901760
    %117 = vmatmul.mubr.f32.gmra.mrb[0].mxu0 %v116
    %v118 = vpop.f32.mrb[0].mxu0
    %v119 = vadd.f32 %v20, %v118
    %v120 = vpop.f32.mrb[0].mxu0
    %121 = vmatprep.mubr.f32.mxu0 0.0
    %v122 = vand.u32 %v35, 4294901760
    %v123 = vsub.f32 %v35, %v122
    %v124 = vand.u32 %v123, 4294901760
    %v125 = vsub.f32 %v123, %v124
    %v126 = vand.u32 %v125, 4294901760
    %127 = vmatmul.mubr.f32.gmra.mrb[0].mxu0 %v126
    %v128 = vpop.f32.mrb[0].mxu0
    %v129 = vadd.f32 %v25, %v128
    %v130 = vpop.f32.mrb[0].mxu0
    %131 = vmatprep.mubr.f32.mxu0 0.0
    %v132 = vand.u32 %v37, 4294901760
    %v133 = vsub.f32 %v37, %v132
    %v134 = vand.u32 %v133, 4294901760
    %v135 = vsub.f32 %v133, %v134
    %v136 = vand.u32 %v135, 4294901760
    %137 = vmatmul.mubr.f32.gmra.mrb[0].mxu0 %v136
    %v138 = vpop.f32.mrb[0].mxu0
    %v139 = vadd.f32 %v30, %v138
    %v140 = vpop.f32.mrb[0].mxu0
    %141 = vdwg.mxu0
    %142 = vmatprep.subr.mxu0 0.0
    %v143 = vand.u32 %v40, 4294901760
    %v144 = vsub.f32 %v40, %v143
    %v145 = vand.u32 %v144, 4294901760
    %v146 = vsub.f32 %v144, %v145
    %v147 = vand.u32 %v146, 4294901760
    %148 = vmatpush1.xpose.msra.mxu0 %v147
    %149 = vmatprep.subr.mxu0 0.0
    %v150 = vand.u32 %v43, 4294901760
    %v151 = vsub.f32 %v43, %v150
    %v152 = vand.u32 %v151, 4294901760
    %v153 = vsub.f32 %v151, %v152
    %v154 = vand.u32 %v153, 4294901760
    %155 = vmatpush1.xpose.msra.mxu0 %v154
    %156 = vmatprep.subr.mxu0 0.0
    %157 = vmatpush1.xpose.msra.mxu0 0.0
    %158 = vmatprep.subr.mxu0 0.0
    %159 = vmatpush1.xpose.msra.mxu0 0.0
    %160 = vmatprep.subr.mxu0 0.0
    %161 = vmatpush1.xpose.msra.mxu0 0.0
    %162 = vmatprep.subr.mxu0 0.0
    %163 = vmatpush1.xpose.msra.mxu0 0.0
    %164 = vmatprep.subr.mxu0 0.0
    %165 = vmatpush1.xpose.msra.mxu0 0.0
    %166 = vmatprep.subr.mxu0 0.0
    %167 = vmatpush1.xpose.msra.mxu0 0.0
    %168 = vmatprep.subr.mxu0 0.0
    %169 = vmatpush1.xpose.msra.mxu0 0.0
    %170 = vmatprep.subr.mxu0 0.0
    %171 = vmatpush1.xpose.msra.mxu0 0.0
    %172 = vmatprep.subr.mxu0 0.0
    %173 = vmatpush1.xpose.msra.mxu0 0.0
    %174 = vmatprep.subr.mxu0 0.0
    %175 = vmatpush1.xpose.msra.mxu0 0.0
    %176 = vmatprep.subr.mxu0 0.0
    %177 = vmatpush1.xpose.msra.mxu0 0.0
    %178 = vmatprep.subr.mxu0 0.0
    %179 = vmatpush1.xpose.msra.mxu0 0.0
    %180 = vmatprep.subr.mxu0 0.0
    %181 = vmatpush1.xpose.msra.mxu0 0.0
    %182 = vmatprep.subr.mxu0 0.0
    %183 = vmatpush1.xpose.msra.mxu0 0.0
    %184 = vmatprep.subr.mxu0 0.0
    %185 = vmatpush1.xpose.msra.mxu0 0.0
    %186 = vmatprep.subr.mxu0 0.0
    %187 = vmatpush1.xpose.msra.mxu0 0.0
    %188 = vmatprep.subr.mxu0 0.0
    %189 = vmatpush1.xpose.msra.mxu0 0.0
    %190 = vmatprep.subr.mxu0 0.0
    %191 = vmatpush1.xpose.msra.mxu0 0.0
    %192 = vmatprep.subr.mxu0 0.0
    %193 = vmatpush1.xpose.msra.mxu0 0.0
    %194 = vmatprep.subr.mxu0 0.0
    %195 = vmatpush1.xpose.msra.mxu0 0.0
    %196 = vmatprep.subr.mxu0 0.0
    %197 = vmatpush1.xpose.msra.mxu0 0.0
    %198 = vmatprep.subr.mxu0 0.0
    %199 = vmatpush1.xpose.msra.mxu0 0.0
    %200 = vmatprep.subr.mxu0 0.0
    %201 = vmatpush1.xpose.msra.mxu0 0.0
    %202 = vmatprep.subr.mxu0 0.0
    %203 = vmatpush1.xpose.msra.mxu0 0.0
    %204 = vmatprep.subr.mxu0 0.0
    %205 = vmatpush1.xpose.msra.mxu0 0.0
    %206 = vmatprep.subr.mxu0 0.0
    %207 = vmatpush1.xpose.msra.mxu0 0.0
    %208 = vmatprep.subr.mxu0 0.0
    %209 = vmatpush1.xpose.msra.mxu0 0.0
    %210 = vmatprep.subr.mxu0 0.0
    %211 = vmatpush1.xpose.msra.mxu0 0.0
    %212 = vmatprep.subr.mxu0 0.0
    %213 = vmatpush1.xpose.msra.mxu0 0.0
    %214 = vmatprep.subr.mxu0 0.0
    %215 = vmatpush1.xpose.msra.mxu0 0.0
    %216 = vmatprep.mubr.f32.mxu0 0.0
    %v217 = vand.u32 %v33, 4294901760
    %218 = vmatmul.mubr.f32.gmra.mrb[0].mxu0 %v217
    %v219 = vpop.f32.mrb[0].mxu0
    %v220 = vadd.f32 %v119, %v219
    %v221 = vpop.f32.mrb[0].mxu0
    %222 = vmatprep.mubr.f32.mxu0 0.0
    %v223 = vand.u32 %v35, 4294901760
    %224 = vmatmul.mubr.f32.gmra.mrb[0].mxu0 %v223
    %v225 = vpop.f32.mrb[0].mxu0
    %v226 = vadd.f32 %v129, %v225
    %v227 = vpop.f32.mrb[0].mxu0
    %228 = vmatprep.mubr.f32.mxu0 0.0
    %v229 = vand.u32 %v37, 4294901760
    %230 = vmatmul.mubr.f32.gmra.mrb[0].mxu0 %v229
    %v231 = vpop.f32.mrb[0].mxu0
    %v232 = vadd.f32 %v139, %v231
    %v233 = vpop.f32.mrb[0].mxu0
    %234 = vdwg.mxu0
    %235 = vmatprep.subr.mxu0 0.0
    %v236 = vand.u32 %v40, 4294901760
    %v237 = vsub.f32 %v40, %v236
    %238 = vmatpush1.xpose.msra.mxu0 %v237
    %239 = vmatprep.subr.mxu0 0.0
    %v240 = vand.u32 %v43, 4294901760
    %v241 = vsub.f32 %v43, %v240
    %242 = vmatpush1.xpose.msra.mxu0 %v241
    %243 = vmatprep.subr.mxu0 0.0
    %244 = vmatpush1.xpose.msra.mxu0 0.0
    %245 = vmatprep.subr.mxu0 0.0
    %246 = vmatpush1.xpose.msra.mxu0 0.0
    %247 = vmatprep.subr.mxu0 0.0
    %248 = vmatpush1.xpose.msra.mxu0 0.0
    %249 = vmatprep.subr.mxu0 0.0
    %250 = vmatpush1.xpose.msra.mxu0 0.0
    %251 = vmatprep.subr.mxu0 0.0
    %252 = vmatpush1.xpose.msra.mxu0 0.0
    %253 = vmatprep.subr.mxu0 0.0
    %254 = vmatpush1.xpose.msra.mxu0 0.0
    %255 = vmatprep.subr.mxu0 0.0
    %256 = vmatpush1.xpose.msra.mxu0 0.0
    %257 = vmatprep.subr.mxu0 0.0
    %258 = vmatpush1.xpose.msra.mxu0 0.0
    %259 = vmatprep.subr.mxu0 0.0
    %260 = vmatpush1.xpose.msra.mxu0 0.0
    %261 = vmatprep.subr.mxu0 0.0
    %262 = vmatpush1.xpose.msra.mxu0 0.0
    %263 = vmatprep.subr.mxu0 0.0
    %264 = vmatpush1.xpose.msra.mxu0 0.0
    %265 = vmatprep.subr.mxu0 0.0
    %266 = vmatpush1.xpose.msra.mxu0 0.0
    %267 = vmatprep.subr.mxu0 0.0
    %268 = vmatpush1.xpose.msra.mxu0 0.0
    %269 = vmatprep.subr.mxu0 0.0
    %270 = vmatpush1.xpose.msra.mxu0 0.0
    %271 = vmatprep.subr.mxu0 0.0
    %272 = vmatpush1.xpose.msra.mxu0 0.0
    %273 = vmatprep.subr.mxu0 0.0
    %274 = vmatpush1.xpose.msra.mxu0 0.0
    %275 = vmatprep.subr.mxu0 0.0
    %276 = vmatpush1.xpose.msra.mxu0 0.0
    %277 = vmatprep.subr.mxu0 0.0
    %278 = vmatpush1.xpose.msra.mxu0 0.0
    %279 = vmatprep.subr.mxu0 0.0
    %280 = vmatpush1.xpose.msra.mxu0 0.0
    %281 = vmatprep.subr.mxu0 0.0
    %282 = vmatpush1.xpose.msra.mxu0 0.0
    %283 = vmatprep.subr.mxu0 0.0
    %284 = vmatpush1.xpose.msra.mxu0 0.0
    %285 = vmatprep.subr.mxu0 0.0
    %286 = vmatpush1.xpose.msra.mxu0 0.0
    %287 = vmatprep.subr.mxu0 0.0
    %288 = vmatpush1.xpose.msra.mxu0 0.0
    %289 = vmatprep.subr.mxu0 0.0
    %290 = vmatpush1.xpose.msra.mxu0 0.0
    %291 = vmatprep.subr.mxu0 0.0
    %292 = vmatpush1.xpose.msra.mxu0 0.0
    %293 = vmatprep.subr.mxu0 0.0
    %294 = vmatpush1.xpose.msra.mxu0 0.0
    %295 = vmatprep.subr.mxu0 0.0
    %296 = vmatpush1.xpose.msra.mxu0 0.0
    %297 = vmatprep.subr.mxu0 0.0
    %298 = vmatpush1.xpose.msra.mxu0 0.0
    %299 = vmatprep.subr.mxu0 0.0
    %300 = vmatpush1.xpose.msra.mxu0 0.0
    %301 = vmatprep.subr.mxu0 0.0
    %302 = vmatpush1.xpose.msra.mxu0 0.0
    %303 = vmatprep.mubr.f32.mxu0 0.0
    %v304 = vand.u32 %v33, 4294901760
    %v305 = vsub.f32 %v33, %v304
    %306 = vmatmul.mubr.f32.gmra.mrb[0].mxu0 %v305
    %v307 = vpop.f32.mrb[0].mxu0
    %v308 = vadd.f32 %v220, %v307
    %v309 = vpop.f32.mrb[0].mxu0
    %310 = vmatprep.mubr.f32.mxu0 0.0
    %v311 = vand.u32 %v35, 4294901760
    %v312 = vsub.f32 %v35, %v311
    %313 = vmatmul.mubr.f32.gmra.mrb[0].mxu0 %v312
    %v314 = vpop.f32.mrb[0].mxu0
    %v315 = vadd.f32 %v226, %v314
    %v316 = vpop.f32.mrb[0].mxu0
    %317 = vmatprep.mubr.f32.mxu0 0.0
    %v318 = vand.u32 %v37, 4294901760
    %v319 = vsub.f32 %v37, %v318
    %320 = vmatmul.mubr.f32.gmra.mrb[0].mxu0 %v319
    %v321 = vpop.f32.mrb[0].mxu0
    %v322 = vadd.f32 %v232, %v321
    %v323 = vpop.f32.mrb[0].mxu0
    %324 = vdwg.mxu0
    %325 = vmatprep.subr.mxu0 0.0
    %v326 = vand.u32 %v40, 4294901760
    %327 = vmatpush1.xpose.msra.mxu0 %v326
    %328 = vmatprep.subr.mxu0 0.0
    %v329 = vand.u32 %v43, 4294901760
    %330 = vmatpush1.xpose.msra.mxu0 %v329
    %331 = vmatprep.subr.mxu0 0.0
    %332 = vmatpush1.xpose.msra.mxu0 0.0
    %333 = vmatprep.subr.mxu0 0.0
    %334 = vmatpush1.xpose.msra.mxu0 0.0
    %335 = vmatprep.subr.mxu0 0.0
    %336 = vmatpush1.xpose.msra.mxu0 0.0
    %337 = vmatprep.subr.mxu0 0.0
    %338 = vmatpush1.xpose.msra.mxu0 0.0
    %339 = vmatprep.subr.mxu0 0.0
    %340 = vmatpush1.xpose.msra.mxu0 0.0
    %341 = vmatprep.subr.mxu0 0.0
    %342 = vmatpush1.xpose.msra.mxu0 0.0
    %343 = vmatprep.subr.mxu0 0.0
    %344 = vmatpush1.xpose.msra.mxu0 0.0
    %345 = vmatprep.subr.mxu0 0.0
    %346 = vmatpush1.xpose.msra.mxu0 0.0
    %347 = vmatprep.subr.mxu0 0.0
    %348 = vmatpush1.xpose.msra.mxu0 0.0
    %349 = vmatprep.subr.mxu0 0.0
    %350 = vmatpush1.xpose.msra.mxu0 0.0
    %351 = vmatprep.subr.mxu0 0.0
    %352 = vmatpush1.xpose.msra.mxu0 0.0
    %353 = vmatprep.subr.mxu0 0.0
    %354 = vmatpush1.xpose.msra.mxu0 0.0
    %355 = vmatprep.subr.mxu0 0.0
    %356 = vmatpush1.xpose.msra.mxu0 0.0
    %357 = vmatprep.subr.mxu0 0.0
    %358 = vmatpush1.xpose.msra.mxu0 0.0
    %359 = vmatprep.subr.mxu0 0.0
    %360 = vmatpush1.xpose.msra.mxu0 0.0
    %361 = vmatprep.subr.mxu0 0.0
    %362 = vmatpush1.xpose.msra.mxu0 0.0
    %363 = vmatprep.subr.mxu0 0.0
    %364 = vmatpush1.xpose.msra.mxu0 0.0
    %365 = vmatprep.subr.mxu0 0.0
    %366 = vmatpush1.xpose.msra.mxu0 0.0
    %367 = vmatprep.subr.mxu0 0.0
    %368 = vmatpush1.xpose.msra.mxu0 0.0
    %369 = vmatprep.subr.mxu0 0.0
    %370 = vmatpush1.xpose.msra.mxu0 0.0
    %371 = vmatprep.subr.mxu0 0.0
    %372 = vmatpush1.xpose.msra.mxu0 0.0
    %373 = vmatprep.subr.mxu0 0.0
    %374 = vmatpush1.xpose.msra.mxu0 0.0
    %375 = vmatprep.subr.mxu0 0.0
    %376 = vmatpush1.xpose.msra.mxu0 0.0
    %377 = vmatprep.subr.mxu0 0.0
    %378 = vmatpush1.xpose.msra.mxu0 0.0
    %379 = vmatprep.subr.mxu0 0.0
    %380 = vmatpush1.xpose.msra.mxu0 0.0
    %381 = vmatprep.subr.mxu0 0.0
    %382 = vmatpush1.xpose.msra.mxu0 0.0
    %383 = vmatprep.subr.mxu0 0.0
    %384 = vmatpush1.xpose.msra.mxu0 0.0
    %385 = vmatprep.subr.mxu0 0.0
    %386 = vmatpush1.xpose.msra.mxu0 0.0
    %387 = vmatprep.subr.mxu0 0.0
    %388 = vmatpush1.xpose.msra.mxu0 0.0
    %389 = vmatprep.subr.mxu0 0.0
    %390 = vmatpush1.xpose.msra.mxu0 0.0
    %391 = vmatprep.mubr.f32.mxu0 0.0
    %v392 = vand.u32 %v33, 4294901760
    %v393 = vsub.f32 %v33, %v392
    %v394 = vand.u32 %v393, 4294901760
    %395 = vmatmul.mubr.f32.gmra.mrb[0].mxu0 %v394
    %v396 = vpop.f32.mrb[0].mxu0
    %v397 = vadd.f32 %v308, %v396
    %v398 = vpop.f32.mrb[0].mxu0
    %399 = vmatprep.mubr.f32.mxu0 0.0
    %v400 = vand.u32 %v35, 4294901760
    %v401 = vsub.f32 %v35, %v400
    %v402 = vand.u32 %v401, 4294901760
    %403 = vmatmul.mubr.f32.gmra.mrb[0].mxu0 %v402
    %v404 = vpop.f32.mrb[0].mxu0
    %v405 = vadd.f32 %v315, %v404
    %v406 = vpop.f32.mrb[0].mxu0
    %407 = vmatprep.mubr.f32.mxu0 0.0
    %v408 = vand.u32 %v37, 4294901760
    %v409 = vsub.f32 %v37, %v408
    %v410 = vand.u32 %v409, 4294901760
    %411 = vmatmul.mubr.f32.gmra.mrb[0].mxu0 %v410
    %v412 = vpop.f32.mrb[0].mxu0
    %v413 = vadd.f32 %v322, %v412
    %v414 = vpop.f32.mrb[0].mxu0
    %415 = vdwg.mxu0
    %416 = vmatprep.subr.mxu0 0.0
    %v417 = vand.u32 %v40, 4294901760
    %v418 = vsub.f32 %v40, %v417
    %v419 = vand.u32 %v418, 4294901760
    %420 = vmatpush1.xpose.msra.mxu0 %v419
    %421 = vmatprep.subr.mxu0 0.0
    %v422 = vand.u32 %v43, 4294901760
    %v423 = vsub.f32 %v43, %v422
    %v424 = vand.u32 %v423, 4294901760
    %425 = vmatpush1.xpose.msra.mxu0 %v424
    %426 = vmatprep.subr.mxu0 0.0
    %427 = vmatpush1.xpose.msra.mxu0 0.0
    %428 = vmatprep.subr.mxu0 0.0
    %429 = vmatpush1.xpose.msra.mxu0 0.0
    %430 = vmatprep.subr.mxu0 0.0
    %431 = vmatpush1.xpose.msra.mxu0 0.0
    %432 = vmatprep.subr.mxu0 0.0
    %433 = vmatpush1.xpose.msra.mxu0 0.0
    %434 = vmatprep.subr.mxu0 0.0
    %435 = vmatpush1.xpose.msra.mxu0 0.0
    %436 = vmatprep.subr.mxu0 0.0
    %437 = vmatpush1.xpose.msra.mxu0 0.0
    %438 = vmatprep.subr.mxu0 0.0
    %439 = vmatpush1.xpose.msra.mxu0 0.0
    %440 = vmatprep.subr.mxu0 0.0
    %441 = vmatpush1.xpose.msra.mxu0 0.0
    %442 = vmatprep.subr.mxu0 0.0
    %443 = vmatpush1.xpose.msra.mxu0 0.0
    %444 = vmatprep.subr.mxu0 0.0
    %445 = vmatpush1.xpose.msra.mxu0 0.0
    %446 = vmatprep.subr.mxu0 0.0
    %447 = vmatpush1.xpose.msra.mxu0 0.0
    %448 = vmatprep.subr.mxu0 0.0
    %449 = vmatpush1.xpose.msra.mxu0 0.0
    %450 = vmatprep.subr.mxu0 0.0
    %451 = vmatpush1.xpose.msra.mxu0 0.0
    %452 = vmatprep.subr.mxu0 0.0
    %453 = vmatpush1.xpose.msra.mxu0 0.0
    %454 = vmatprep.subr.mxu0 0.0
    %455 = vmatpush1.xpose.msra.mxu0 0.0
    %456 = vmatprep.subr.mxu0 0.0
    %457 = vmatpush1.xpose.msra.mxu0 0.0
    %458 = vmatprep.subr.mxu0 0.0
    %459 = vmatpush1.xpose.msra.mxu0 0.0
    %460 = vmatprep.subr.mxu0 0.0
    %461 = vmatpush1.xpose.msra.mxu0 0.0
    %462 = vmatprep.subr.mxu0 0.0
    %463 = vmatpush1.xpose.msra.mxu0 0.0
    %464 = vmatprep.subr.mxu0 0.0
    %465 = vmatpush1.xpose.msra.mxu0 0.0
    %466 = vmatprep.subr.mxu0 0.0
    %467 = vmatpush1.xpose.msra.mxu0 0.0
    %468 = vmatprep.subr.mxu0 0.0
    %469 = vmatpush1.xpose.msra.mxu0 0.0
    %470 = vmatprep.subr.mxu0 0.0
    %471 = vmatpush1.xpose.msra.mxu0 0.0
    %472 = vmatprep.subr.mxu0 0.0
    %473 = vmatpush1.xpose.msra.mxu0 0.0
    %474 = vmatprep.subr.mxu0 0.0
    %475 = vmatpush1.xpose.msra.mxu0 0.0
    %476 = vmatprep.subr.mxu0 0.0
    %477 = vmatpush1.xpose.msra.mxu0 0.0
    %478 = vmatprep.subr.mxu0 0.0
    %479 = vmatpush1.xpose.msra.mxu0 0.0
    %480 = vmatprep.subr.mxu0 0.0
    %481 = vmatpush1.xpose.msra.mxu0 0.0
    %482 = vmatprep.subr.mxu0 0.0
    %483 = vmatpush1.xpose.msra.mxu0 0.0
    %484 = vmatprep.subr.mxu0 0.0
    %485 = vmatpush1.xpose.msra.mxu0 0.0
    %486 = vmatprep.mubr.f32.mxu0 0.0
    %v487 = vand.u32 %v33, 4294901760
    %488 = vmatmul.mubr.f32.gmra.mrb[0].mxu0 %v487
    %v489 = vpop.f32.mrb[0].mxu0
    %v490 = vadd.f32 %v397, %v489
    %v491 = vpop.f32.mrb[0].mxu0
    %492 = vmatprep.mubr.f32.mxu0 0.0
    %v493 = vand.u32 %v35, 4294901760
    %494 = vmatmul.mubr.f32.gmra.mrb[0].mxu0 %v493
    %v495 = vpop.f32.mrb[0].mxu0
    %v496 = vadd.f32 %v405, %v495
    %v497 = vpop.f32.mrb[0].mxu0
    %498 = vmatprep.mubr.f32.mxu0 0.0
    %v499 = vand.u32 %v37, 4294901760
    %500 = vmatmul.mubr.f32.gmra.mrb[0].mxu0 %v499
    %v501 = vpop.f32.mrb[0].mxu0
    %v502 = vadd.f32 %v413, %v501
    %v503 = vpop.f32.mrb[0].mxu0
    %504 = vdwg.mxu0
    %505 = vmatprep.subr.mxu0 0.0
    %v506 = vand.u32 %v40, 4294901760
    %507 = vmatpush1.xpose.msra.mxu0 %v506
    %508 = vmatprep.subr.mxu0 0.0
    %v509 = vand.u32 %v43, 4294901760
    %510 = vmatpush1.xpose.msra.mxu0 %v509
    %511 = vmatprep.subr.mxu0 0.0
    %512 = vmatpush1.xpose.msra.mxu0 0.0
    %513 = vmatprep.subr.mxu0 0.0
    %514 = vmatpush1.xpose.msra.mxu0 0.0
    %515 = vmatprep.subr.mxu0 0.0
    %516 = vmatpush1.xpose.msra.mxu0 0.0
    %517 = vmatprep.subr.mxu0 0.0
    %518 = vmatpush1.xpose.msra.mxu0 0.0
    %519 = vmatprep.subr.mxu0 0.0
    %520 = vmatpush1.xpose.msra.mxu0 0.0
    %521 = vmatprep.subr.mxu0 0.0
    %522 = vmatpush1.xpose.msra.mxu0 0.0
    %523 = vmatprep.subr.mxu0 0.0
    %524 = vmatpush1.xpose.msra.mxu0 0.0
    %525 = vmatprep.subr.mxu0 0.0
    %526 = vmatpush1.xpose.msra.mxu0 0.0
    %527 = vmatprep.subr.mxu0 0.0
    %528 = vmatpush1.xpose.msra.mxu0 0.0
    %529 = vmatprep.subr.mxu0 0.0
    %530 = vmatpush1.xpose.msra.mxu0 0.0
    %531 = vmatprep.subr.mxu0 0.0
    %532 = vmatpush1.xpose.msra.mxu0 0.0
    %533 = vmatprep.subr.mxu0 0.0
    %534 = vmatpush1.xpose.msra.mxu0 0.0
    %535 = vmatprep.subr.mxu0 0.0
    %536 = vmatpush1.xpose.msra.mxu0 0.0
    %537 = vmatprep.subr.mxu0 0.0
    %538 = vmatpush1.xpose.msra.mxu0 0.0
    %539 = vmatprep.subr.mxu0 0.0
    %540 = vmatpush1.xpose.msra.mxu0 0.0
    %541 = vmatprep.subr.mxu0 0.0
    %542 = vmatpush1.xpose.msra.mxu0 0.0
    %543 = vmatprep.subr.mxu0 0.0
    %544 = vmatpush1.xpose.msra.mxu0 0.0
    %545 = vmatprep.subr.mxu0 0.0
    %546 = vmatpush1.xpose.msra.mxu0 0.0
    %547 = vmatprep.subr.mxu0 0.0
    %548 = vmatpush1.xpose.msra.mxu0 0.0
    %549 = vmatprep.subr.mxu0 0.0
    %550 = vmatpush1.xpose.msra.mxu0 0.0
    %551 = vmatprep.subr.mxu0 0.0
    %552 = vmatpush1.xpose.msra.mxu0 0.0
    %553 = vmatprep.subr.mxu0 0.0
    %554 = vmatpush1.xpose.msra.mxu0 0.0
    %555 = vmatprep.subr.mxu0 0.0
    %556 = vmatpush1.xpose.msra.mxu0 0.0
    %557 = vmatprep.subr.mxu0 0.0
    %558 = vmatpush1.xpose.msra.mxu0 0.0
    %559 = vmatprep.subr.mxu0 0.0
    %560 = vmatpush1.xpose.msra.mxu0 0.0
    %561 = vmatprep.subr.mxu0 0.0
    %562 = vmatpush1.xpose.msra.mxu0 0.0
    %563 = vmatprep.subr.mxu0 0.0
    %564 = vmatpush1.xpose.msra.mxu0 0.0
    %565 = vmatprep.subr.mxu0 0.0
    %566 = vmatpush1.xpose.msra.mxu0 0.0
    %567 = vmatprep.subr.mxu0 0.0
    %568 = vmatpush1.xpose.msra.mxu0 0.0
    %569 = vmatprep.subr.mxu0 0.0
    %570 = vmatpush1.xpose.msra.mxu0 0.0
    %571 = vmatprep.mubr.f32.mxu0 0.0
    %v572 = vand.u32 %v33, 4294901760
    %573 = vmatmul.mubr.f32.gmra.mrb[0].mxu0 %v572
    %v574 = vpop.f32.mrb[0].mxu0
    %v575 = vadd.f32 %v490, %v574
    %v576 = vpop.f32.mrb[0].mxu0
    %577 = vmatprep.mubr.f32.mxu0 0.0
    %v578 = vand.u32 %v35, 4294901760
    %579 = vmatmul.mubr.f32.gmra.mrb[0].mxu0 %v578
    %v580 = vpop.f32.mrb[0].mxu0
    %v581 = vadd.f32 %v496, %v580
    %v582 = vpop.f32.mrb[0].mxu0
    %583 = vmatprep.mubr.f32.mxu0 0.0
    %v584 = vand.u32 %v37, 4294901760
    %585 = vmatmul.mubr.f32.gmra.mrb[0].mxu0 %v584
    %v586 = vpop.f32.mrb[0].mxu0
    %v587 = vadd.f32 %v502, %v586
    %v588 = vpop.f32.mrb[0].mxu0
    %589 = vdwg.mxu0
    %v590 = vtanh.pop %v575
    %v591 = vtanh.pop %v581
    %v592 = vtanh.pop %v587
    %593 = vset.pattern.permute.xlu0 52
    %594 = vperm.xlu0 %593, %v12
    %v595 = vpop.permute.xlu0 %594
    %597 = vset.pattern.permute.xlu0 52
    %598 = vperm.xlu0 %597, %v13
    %v599 = vpop.permute.xlu0 %598
    %601 = vset.pattern.permute.xlu0 52
    %602 = vperm.xlu0 %601, %v14
    %v603 = vpop.permute.xlu0 %602
    %605 = vrot.lane.b32.xlu0 %v12, 120
    %v606 = vpop.permute.xlu0 %605
    %607 = vrot.lane.b32.xlu0 %v13, 120
    %v608 = vpop.permute.xlu0 %607
    %609 = vrot.lane.b32.xlu0 %v14, 120
    %v610 = vpop.permute.xlu0 %609
    %vm611 = vcmask 195584
    %v612 = vsel %vm611, %v606, 0
    %v614 = vsel %vm611, %v608, 0
    %v616 = vsel %vm611, %v610, 0
    %618 = vmatprep.subr.mxu0 0.0
    %v619 = vand.u32 %v590, 4294901760
    %620 = vmatpush1.msra.mxu0 %v619
    %621 = vmatprep.subr.mxu0 0.0
    %v622 = vand.u32 %v591, 4294901760
    %623 = vmatpush1.msra.mxu0 %v622
    %624 = vmatprep.subr.mxu0 0.0
    %v625 = vand.u32 %v592, 4294901760
    %626 = vmatpush1.msra.mxu0 %v625
    %627 = vmatprep.subr.mxu0 0.0
    %628 = vmatpush1.msra.mxu0 0.0
    %629 = vmatprep.subr.mxu0 0.0
    %630 = vmatpush1.msra.mxu0 0.0
    %631 = vmatprep.subr.mxu0 0.0
    %632 = vmatpush1.msra.mxu0 0.0
    %633 = vmatprep.subr.mxu0 0.0
    %634 = vmatpush1.msra.mxu0 0.0
    %635 = vmatprep.subr.mxu0 0.0
    %636 = vmatpush1.msra.mxu0 0.0
    %637 = vmatprep.subr.mxu0 0.0
    %638 = vmatpush1.msra.mxu0 0.0
    %639 = vmatprep.subr.mxu0 0.0
    %640 = vmatpush1.msra.mxu0 0.0
    %641 = vmatprep.subr.mxu0 0.0
    %642 = vmatpush1.msra.mxu0 0.0
    %643 = vmatprep.subr.mxu0 0.0
    %644 = vmatpush1.msra.mxu0 0.0
    %645 = vmatprep.subr.mxu0 0.0
    %646 = vmatpush1.msra.mxu0 0.0
    %647 = vmatprep.subr.mxu0 0.0
    %648 = vmatpush1.msra.mxu0 0.0
    %649 = vmatprep.subr.mxu0 0.0
    %650 = vmatpush1.msra.mxu0 0.0
    %651 = vmatprep.subr.mxu0 0.0
    %652 = vmatpush1.msra.mxu0 0.0
    %653 = vmatprep.subr.mxu0 0.0
    %654 = vmatpush1.msra.mxu0 0.0
    %655 = vmatprep.subr.mxu0 0.0
    %656 = vmatpush1.msra.mxu0 0.0
    %657 = vmatprep.subr.mxu0 0.0
    %658 = vmatpush1.msra.mxu0 0.0
    %659 = vmatprep.subr.mxu0 0.0
    %660 = vmatpush1.msra.mxu0 0.0
    %661 = vmatprep.subr.mxu0 0.0
    %662 = vmatpush1.msra.mxu0 0.0
    %663 = vmatprep.subr.mxu0 0.0
    %664 = vmatpush1.msra.mxu0 0.0
    %665 = vmatprep.subr.mxu0 0.0
    %666 = vmatpush1.msra.mxu0 0.0
    %667 = vmatprep.subr.mxu0 0.0
    %668 = vmatpush1.msra.mxu0 0.0
    %669 = vmatprep.subr.mxu0 0.0
    %670 = vmatpush1.msra.mxu0 0.0
    %671 = vmatprep.subr.mxu0 0.0
    %672 = vmatpush1.msra.mxu0 0.0
    %673 = vmatprep.subr.mxu0 0.0
    %674 = vmatpush1.msra.mxu0 0.0
    %675 = vmatprep.subr.mxu0 0.0
    %676 = vmatpush1.msra.mxu0 0.0
    %677 = vmatprep.subr.mxu0 0.0
    %678 = vmatpush1.msra.mxu0 0.0
    %679 = vmatprep.subr.mxu0 0.0
    %680 = vmatpush1.msra.mxu0 0.0
    %681 = vmatprep.subr.mxu0 0.0
    %682 = vmatpush1.msra.mxu0 0.0
    %683 = vmatprep.subr.mxu0 0.0
    %684 = vmatpush1.msra.mxu0 0.0
    %685 = vmatprep.mubr.f32.mxu0 0.0
    %v686 = vand.u32 %v612, 4294901760
    %v687 = vsub.f32 %v612, %v686
    %v688 = vand.u32 %v687, 4294901760
    %v689 = vsub.f32 %v687, %v688
    %v690 = vand.u32 %v689, 4294901760
    %691 = vmatmul.mubr.f32.gmra.mrb[0].mxu0 %v690
    %v692 = vpop.f32.mrb[0].mxu0
    %v693 = vadd.f32 %v595, %v692
    %v694 = vpop.f32.mrb[0].mxu0
    %695 = vmatprep.mubr.f32.mxu0 0.0
    %v696 = vand.u32 %v614, 4294901760
    %v697 = vsub.f32 %v614, %v696
    %v698 = vand.u32 %v697, 4294901760
    %v699 = vsub.f32 %v697, %v698
    %v700 = vand.u32 %v699, 4294901760
    %701 = vmatmul.mubr.f32.gmra.mrb[0].mxu0 %v700
    %v702 = vpop.f32.mrb[0].mxu0
    %v703 = vadd.f32 %v599, %v702
    %v704 = vpop.f32.mrb[0].mxu0
    %705 = vmatprep.mubr.f32.mxu0 0.0
    %v706 = vand.u32 %v616, 4294901760
    %v707 = vsub.f32 %v616, %v706
    %v708 = vand.u32 %v707, 4294901760
    %v709 = vsub.f32 %v707, %v708
    %v710 = vand.u32 %v709, 4294901760
    %711 = vmatmul.mubr.f32.gmra.mrb[0].mxu0 %v710
    %v712 = vpop.f32.mrb[0].mxu0
    %v713 = vadd.f32 %v603, %v712
    %v714 = vpop.f32.mrb[0].mxu0
    %715 = vdwg.mxu0
    %716 = vmatprep.subr.mxu0 0.0
    %v717 = vand.u32 %v590, 4294901760
    %v718 = vsub.f32 %v590, %v717
    %v719 = vand.u32 %v718, 4294901760
    %v720 = vsub.f32 %v718, %v719
    %v721 = vand.u32 %v720, 4294901760
    %722 = vmatpush1.msra.mxu0 %v721
    %723 = vmatprep.subr.mxu0 0.0
    %v724 = vand.u32 %v591, 4294901760
    %v725 = vsub.f32 %v591, %v724
    %v726 = vand.u32 %v725, 4294901760
    %v727 = vsub.f32 %v725, %v726
    %v728 = vand.u32 %v727, 4294901760
    %729 = vmatpush1.msra.mxu0 %v728
    %730 = vmatprep.subr.mxu0 0.0
    %v731 = vand.u32 %v592, 4294901760
    %v732 = vsub.f32 %v592, %v731
    %v733 = vand.u32 %v732, 4294901760
    %v734 = vsub.f32 %v732, %v733
    %v735 = vand.u32 %v734, 4294901760
    %736 = vmatpush1.msra.mxu0 %v735
    %737 = vmatprep.subr.mxu0 0.0
    %738 = vmatpush1.msra.mxu0 0.0
    %739 = vmatprep.subr.mxu0 0.0
    %740 = vmatpush1.msra.mxu0 0.0
    %741 = vmatprep.subr.mxu0 0.0
    %742 = vmatpush1.msra.mxu0 0.0
    %743 = vmatprep.subr.mxu0 0.0
    %744 = vmatpush1.msra.mxu0 0.0
    %745 = vmatprep.subr.mxu0 0.0
    %746 = vmatpush1.msra.mxu0 0.0
    %747 = vmatprep.subr.mxu0 0.0
    %748 = vmatpush1.msra.mxu0 0.0
    %749 = vmatprep.subr.mxu0 0.0
    %750 = vmatpush1.msra.mxu0 0.0
    %751 = vmatprep.subr.mxu0 0.0
    %752 = vmatpush1.msra.mxu0 0.0
    %753 = vmatprep.subr.mxu0 0.0
    %754 = vmatpush1.msra.mxu0 0.0
    %755 = vmatprep.subr.mxu0 0.0
    %756 = vmatpush1.msra.mxu0 0.0
    %757 = vmatprep.subr.mxu0 0.0
    %758 = vmatpush1.msra.mxu0 0.0
    %759 = vmatprep.subr.mxu0 0.0
    %760 = vmatpush1.msra.mxu0 0.0
    %761 = vmatprep.subr.mxu0 0.0
    %762 = vmatpush1.msra.mxu0 0.0
    %763 = vmatprep.subr.mxu0 0.0
    %764 = vmatpush1.msra.mxu0 0.0
    %765 = vmatprep.subr.mxu0 0.0
    %766 = vmatpush1.msra.mxu0 0.0
    %767 = vmatprep.subr.mxu0 0.0
    %768 = vmatpush1.msra.mxu0 0.0
    %769 = vmatprep.subr.mxu0 0.0
    %770 = vmatpush1.msra.mxu0 0.0
    %771 = vmatprep.subr.mxu0 0.0
    %772 = vmatpush1.msra.mxu0 0.0
    %773 = vmatprep.subr.mxu0 0.0
    %774 = vmatpush1.msra.mxu0 0.0
    %775 = vmatprep.subr.mxu0 0.0
    %776 = vmatpush1.msra.mxu0 0.0
    %777 = vmatprep.subr.mxu0 0.0
    %778 = vmatpush1.msra.mxu0 0.0
    %779 = vmatprep.subr.mxu0 0.0
    %780 = vmatpush1.msra.mxu0 0.0
    %781 = vmatprep.subr.mxu0 0.0
    %782 = vmatpush1.msra.mxu0 0.0
    %783 = vmatprep.subr.mxu0 0.0
    %784 = vmatpush1.msra.mxu0 0.0
    %785 = vmatprep.subr.mxu0 0.0
    %786 = vmatpush1.msra.mxu0 0.0
    %787 = vmatprep.subr.mxu0 0.0
    %788 = vmatpush1.msra.mxu0 0.0
    %789 = vmatprep.subr.mxu0 0.0
    %790 = vmatpush1.msra.mxu0 0.0
    %791 = vmatprep.subr.mxu0 0.0
    %792 = vmatpush1.msra.mxu0 0.0
    %793 = vmatprep.subr.mxu0 0.0
    %794 = vmatpush1.msra.mxu0 0.0
    %795 = vmatprep.mubr.f32.mxu0 0.0
    %v796 = vand.u32 %v612, 4294901760
    %797 = vmatmul.mubr.f32.gmra.mrb[0].mxu0 %v796
    %v798 = vpop.f32.mrb[0].mxu0
    %v799 = vadd.f32 %v693, %v798
    %v800 = vpop.f32.mrb[0].mxu0
    %801 = vmatprep.mubr.f32.mxu0 0.0
    %v802 = vand.u32 %v614, 4294901760
    %803 = vmatmul.mubr.f32.gmra.mrb[0].mxu0 %v802
    %v804 = vpop.f32.mrb[0].mxu0
    %v805 = vadd.f32 %v703, %v804
    %v806 = vpop.f32.mrb[0].mxu0
    %807 = vmatprep.mubr.f32.mxu0 0.0
    %v808 = vand.u32 %v616, 4294901760
    %809 = vmatmul.mubr.f32.gmra.mrb[0].mxu0 %v808
    %v810 = vpop.f32.mrb[0].mxu0
    %v811 = vadd.f32 %v713, %v810
    %v812 = vpop.f32.mrb[0].mxu0
    %813 = vdwg.mxu0
    %814 = vmatprep.subr.mxu0 0.0
    %v815 = vand.u32 %v590, 4294901760
    %v816 = vsub.f32 %v590, %v815
    %817 = vmatpush1.msra.mxu0 %v816
    %818 = vmatprep.subr.mxu0 0.0
    %v819 = vand.u32 %v591, 4294901760
    %v820 = vsub.f32 %v591, %v819
    %821 = vmatpush1.msra.mxu0 %v820
    %822 = vmatprep.subr.mxu0 0.0
    %v823 = vand.u32 %v592, 4294901760
    %v824 = vsub.f32 %v592, %v823
    %825 = vmatpush1.msra.mxu0 %v824
    %826 = vmatprep.subr.mxu0 0.0
    %827 = vmatpush1.msra.mxu0 0.0
    %828 = vmatprep.subr.mxu0 0.0
    %829 = vmatpush1.msra.mxu0 0.0
    %830 = vmatprep.subr.mxu0 0.0
    %831 = vmatpush1.msra.mxu0 0.0
    %832 = vmatprep.subr.mxu0 0.0
    %833 = vmatpush1.msra.mxu0 0.0
    %834 = vmatprep.subr.mxu0 0.0
    %835 = vmatpush1.msra.mxu0 0.0
    %836 = vmatprep.subr.mxu0 0.0
    %837 = vmatpush1.msra.mxu0 0.0
    %838 = vmatprep.subr.mxu0 0.0
    %839 = vmatpush1.msra.mxu0 0.0
    %840 = vmatprep.subr.mxu0 0.0
    %841 = vmatpush1.msra.mxu0 0.0
    %842 = vmatprep.subr.mxu0 0.0
    %843 = vmatpush1.msra.mxu0 0.0
    %844 = vmatprep.subr.mxu0 0.0
    %845 = vmatpush1.msra.mxu0 0.0
    %846 = vmatprep.subr.mxu0 0.0
    %847 = vmatpush1.msra.mxu0 0.0
    %848 = vmatprep.subr.mxu0 0.0
    %849 = vmatpush1.msra.mxu0 0.0
    %850 = vmatprep.subr.mxu0 0.0
    %851 = vmatpush1.msra.mxu0 0.0
    %852 = vmatprep.subr.mxu0 0.0
    %853 = vmatpush1.msra.mxu0 0.0
    %854 = vmatprep.subr.mxu0 0.0
    %855 = vmatpush1.msra.mxu0 0.0
    %856 = vmatprep.subr.mxu0 0.0
    %857 = vmatpush1.msra.mxu0 0.0
    %858 = vmatprep.subr.mxu0 0.0
    %859 = vmatpush1.msra.mxu0 0.0
    %860 = vmatprep.subr.mxu0 0.0
    %861 = vmatpush1.msra.mxu0 0.0
    %862 = vmatprep.subr.mxu0 0.0
    %863 = vmatpush1.msra.mxu0 0.0
    %864 = vmatprep.subr.mxu0 0.0
    %865 = vmatpush1.msra.mxu0 0.0
    %866 = vmatprep.subr.mxu0 0.0
    %867 = vmatpush1.msra.mxu0 0.0
    %868 = vmatprep.subr.mxu0 0.0
    %869 = vmatpush1.msra.mxu0 0.0
    %870 = vmatprep.subr.mxu0 0.0
    %871 = vmatpush1.msra.mxu0 0.0
    %872 = vmatprep.subr.mxu0 0.0
    %873 = vmatpush1.msra.mxu0 0.0
    %874 = vmatprep.subr.mxu0 0.0
    %875 = vmatpush1.msra.mxu0 0.0
    %876 = vmatprep.subr.mxu0 0.0
    %877 = vmatpush1.msra.mxu0 0.0
    %878 = vmatprep.subr.mxu0 0.0
    %879 = vmatpush1.msra.mxu0 0.0
    %880 = vmatprep.subr.mxu0 0.0
    %881 = vmatpush1.msra.mxu0 0.0
    %882 = vmatprep.subr.mxu0 0.0
    %883 = vmatpush1.msra.mxu0 0.0
    %884 = vmatprep.mubr.f32.mxu0 0.0
    %v885 = vand.u32 %v612, 4294901760
    %v886 = vsub.f32 %v612, %v885
    %887 = vmatmul.mubr.f32.gmra.mrb[0].mxu0 %v886
    %v888 = vpop.f32.mrb[0].mxu0
    %v889 = vadd.f32 %v799, %v888
    %v890 = vpop.f32.mrb[0].mxu0
    %891 = vmatprep.mubr.f32.mxu0 0.0
    %v892 = vand.u32 %v614, 4294901760
    %v893 = vsub.f32 %v614, %v892
    %894 = vmatmul.mubr.f32.gmra.mrb[0].mxu0 %v893
    %v895 = vpop.f32.mrb[0].mxu0
    %v896 = vadd.f32 %v805, %v895
    %v897 = vpop.f32.mrb[0].mxu0
    %898 = vmatprep.mubr.f32.mxu0 0.0
    %v899 = vand.u32 %v616, 4294901760
    %v900 = vsub.f32 %v616, %v899
    %901 = vmatmul.mubr.f32.gmra.mrb[0].mxu0 %v900
    %v902 = vpop.f32.mrb[0].mxu0
    %v903 = vadd.f32 %v811, %v902
    %v904 = vpop.f32.mrb[0].mxu0
    %905 = vdwg.mxu0
    %906 = vmatprep.subr.mxu0 0.0
    %v907 = vand.u32 %v590, 4294901760
    %908 = vmatpush1.msra.mxu0 %v907
    %909 = vmatprep.subr.mxu0 0.0
    %v910 = vand.u32 %v591, 4294901760
    %911 = vmatpush1.msra.mxu0 %v910
    %912 = vmatprep.subr.mxu0 0.0
    %v913 = vand.u32 %v592, 4294901760
    %914 = vmatpush1.msra.mxu0 %v913
    %915 = vmatprep.subr.mxu0 0.0
    %916 = vmatpush1.msra.mxu0 0.0
    %917 = vmatprep.subr.mxu0 0.0
    %918 = vmatpush1.msra.mxu0 0.0
    %919 = vmatprep.subr.mxu0 0.0
    %920 = vmatpush1.msra.mxu0 0.0
    %921 = vmatprep.subr.mxu0 0.0
    %922 = vmatpush1.msra.mxu0 0.0
    %923 = vmatprep.subr.mxu0 0.0
    %924 = vmatpush1.msra.mxu0 0.0
    %925 = vmatprep.subr.mxu0 0.0
    %926 = vmatpush1.msra.mxu0 0.0
    %927 = vmatprep.subr.mxu0 0.0
    %928 = vmatpush1.msra.mxu0 0.0
    %929 = vmatprep.subr.mxu0 0.0
    %930 = vmatpush1.msra.mxu0 0.0
    %931 = vmatprep.subr.mxu0 0.0
    %932 = vmatpush1.msra.mxu0 0.0
    %933 = vmatprep.subr.mxu0 0.0
    %934 = vmatpush1.msra.mxu0 0.0
    %935 = vmatprep.subr.mxu0 0.0
    %936 = vmatpush1.msra.mxu0 0.0
    %937 = vmatprep.subr.mxu0 0.0
    %938 = vmatpush1.msra.mxu0 0.0
    %939 = vmatprep.subr.mxu0 0.0
    %940 = vmatpush1.msra.mxu0 0.0
    %941 = vmatprep.subr.mxu0 0.0
    %942 = vmatpush1.msra.mxu0 0.0
    %943 = vmatprep.subr.mxu0 0.0
    %944 = vmatpush1.msra.mxu0 0.0
    %945 = vmatprep.subr.mxu0 0.0
    %946 = vmatpush1.msra.mxu0 0.0
    %947 = vmatprep.subr.mxu0 0.0
    %948 = vmatpush1.msra.mxu0 0.0
    %949 = vmatprep.subr.mxu0 0.0
    %950 = vmatpush1.msra.mxu0 0.0
    %951 = vmatprep.subr.mxu0 0.0
    %952 = vmatpush1.msra.mxu0 0.0
    %953 = vmatprep.subr.mxu0 0.0
    %954 = vmatpush1.msra.mxu0 0.0
    %955 = vmatprep.subr.mxu0 0.0
    %956 = vmatpush1.msra.mxu0 0.0
    %957 = vmatprep.subr.mxu0 0.0
    %958 = vmatpush1.msra.mxu0 0.0
    %959 = vmatprep.subr.mxu0 0.0
    %960 = vmatpush1.msra.mxu0 0.0
    %961 = vmatprep.subr.mxu0 0.0
    %962 = vmatpush1.msra.mxu0 0.0
    %963 = vmatprep.subr.mxu0 0.0
    %964 = vmatpush1.msra.mxu0 0.0
    %965 = vmatprep.subr.mxu0 0.0
    %966 = vmatpush1.msra.mxu0 0.0
    %967 = vmatprep.subr.mxu0 0.0
    %968 = vmatpush1.msra.mxu0 0.0
    %969 = vmatprep.subr.mxu0 0.0
    %970 = vmatpush1.msra.mxu0 0.0
    %971 = vmatprep.subr.mxu0 0.0
    %972 = vmatpush1.msra.mxu0 0.0
    %973 = vmatprep.mubr.f32.mxu0 0.0
    %v974 = vand.u32 %v612, 4294901760
    %v975 = vsub.f32 %v612, %v974
    %v976 = vand.u32 %v975, 4294901760
    %977 = vmatmul.mubr.f32.gmra.mrb[0].mxu0 %v976
    %v978 = vpop.f32.mrb[0].mxu0
    %v979 = vadd.f32 %v889, %v978
    %v980 = vpop.f32.mrb[0].mxu0
    %981 = vmatprep.mubr.f32.mxu0 0.0
    %v982 = vand.u32 %v614, 4294901760
    %v983 = vsub.f32 %v614, %v982
    %v984 = vand.u32 %v983, 4294901760
    %985 = vmatmul.mubr.f32.gmra.mrb[0].mxu0 %v984
    %v986 = vpop.f32.mrb[0].mxu0
    %v987 = vadd.f32 %v896, %v986
    %v988 = vpop.f32.mrb[0].mxu0
    %989 = vmatprep.mubr.f32.mxu0 0.0
    %v990 = vand.u32 %v616, 4294901760
    %v991 = vsub.f32 %v616, %v990
    %v992 = vand.u32 %v991, 4294901760
    %993 = vmatmul.mubr.f32.gmra.mrb[0].mxu0 %v992
    %v994 = vpop.f32.mrb[0].mxu0
    %v995 = vadd.f32 %v903, %v994
    %v996 = vpop.f32.mrb[0].mxu0
    %997 = vdwg.mxu0
    %998 = vmatprep.subr.mxu0 0.0
    %v999 = vand.u32 %v590, 4294901760
    %v1000 = vsub.f32 %v590, %v999
    %v1001 = vand.u32 %v1000, 4294901760
    %1002 = vmatpush1.msra.mxu0 %v1001
    %1003 = vmatprep.subr.mxu0 0.0
    %v1004 = vand.u32 %v591, 4294901760
    %v1005 = vsub.f32 %v591, %v1004
    %v1006 = vand.u32 %v1005, 4294901760
    %1007 = vmatpush1.msra.mxu0 %v1006
    %1008 = vmatprep.subr.mxu0 0.0
    %v1009 = vand.u32 %v592, 4294901760
    %v1010 = vsub.f32 %v592, %v1009
    %v1011 = vand.u32 %v1010, 4294901760
    %1012 = vmatpush1.msra.mxu0 %v1011
    %1013 = vmatprep.subr.mxu0 0.0
    %1014 = vmatpush1.msra.mxu0 0.0
    %1015 = vmatprep.subr.mxu0 0.0
    %1016 = vmatpush1.msra.mxu0 0.0
    %1017 = vmatprep.subr.mxu0 0.0
    %1018 = vmatpush1.msra.mxu0 0.0
    %1019 = vmatprep.subr.mxu0 0.0
    %1020 = vmatpush1.msra.mxu0 0.0
    %1021 = vmatprep.subr.mxu0 0.0
    %1022 = vmatpush1.msra.mxu0 0.0
    %1023 = vmatprep.subr.mxu0 0.0
    %1024 = vmatpush1.msra.mxu0 0.0
    %1025 = vmatprep.subr.mxu0 0.0
    %1026 = vmatpush1.msra.mxu0 0.0
    %1027 = vmatprep.subr.mxu0 0.0
    %1028 = vmatpush1.msra.mxu0 0.0
    %1029 = vmatprep.subr.mxu0 0.0
    %1030 = vmatpush1.msra.mxu0 0.0
    %1031 = vmatprep.subr.mxu0 0.0
    %1032 = vmatpush1.msra.mxu0 0.0
    %1033 = vmatprep.subr.mxu0 0.0
    %1034 = vmatpush1.msra.mxu0 0.0
    %1035 = vmatprep.subr.mxu0 0.0
    %1036 = vmatpush1.msra.mxu0 0.0
    %1037 = vmatprep.subr.mxu0 0.0
    %1038 = vmatpush1.msra.mxu0 0.0
    %1039 = vmatprep.subr.mxu0 0.0
    %1040 = vmatpush1.msra.mxu0 0.0
    %1041 = vmatprep.subr.mxu0 0.0
    %1042 = vmatpush1.msra.mxu0 0.0
    %1043 = vmatprep.subr.mxu0 0.0
    %1044 = vmatpush1.msra.mxu0 0.0
    %1045 = vmatprep.subr.mxu0 0.0
    %1046 = vmatpush1.msra.mxu0 0.0
    %1047 = vmatprep.subr.mxu0 0.0
    %1048 = vmatpush1.msra.mxu0 0.0
    %1049 = vmatprep.subr.mxu0 0.0
    %1050 = vmatpush1.msra.mxu0 0.0
    %1051 = vmatprep.subr.mxu0 0.0
    %1052 = vmatpush1.msra.mxu0 0.0
    %1053 = vmatprep.subr.mxu0 0.0
    %1054 = vmatpush1.msra.mxu0 0.0
    %1055 = vmatprep.subr.mxu0 0.0
    %1056 = vmatpush1.msra.mxu0 0.0
    %1057 = vmatprep.subr.mxu0 0.0
    %1058 = vmatpush1.msra.mxu0 0.0
    %1059 = vmatprep.subr.mxu0 0.0
    %1060 = vmatpush1.msra.mxu0 0.0
    %1061 = vmatprep.subr.mxu0 0.0
    %1062 = vmatpush1.msra.mxu0 0.0
    %1063 = vmatprep.subr.mxu0 0.0
    %1064 = vmatpush1.msra.mxu0 0.0
    %1065 = vmatprep.subr.mxu0 0.0
    %1066 = vmatpush1.msra.mxu0 0.0
    %1067 = vmatprep.subr.mxu0 0.0
    %1068 = vmatpush1.msra.mxu0 0.0
    %1069 = vmatprep.subr.mxu0 0.0
    %1070 = vmatpush1.msra.mxu0 0.0
    %1071 = vmatprep.mubr.f32.mxu0 0.0
    %v1072 = vand.u32 %v612, 4294901760
    %1073 = vmatmul.mubr.f32.gmra.mrb[0].mxu0 %v1072
    %v1074 = vpop.f32.mrb[0].mxu0
    %v1075 = vadd.f32 %v979, %v1074
    %v1076 = vpop.f32.mrb[0].mxu0
    %1077 = vmatprep.mubr.f32.mxu0 0.0
    %v1078 = vand.u32 %v614, 4294901760
    %1079 = vmatmul.mubr.f32.gmra.mrb[0].mxu0 %v1078
    %v1080 = vpop.f32.mrb[0].mxu0
    %v1081 = vadd.f32 %v987, %v1080
    %v1082 = vpop.f32.mrb[0].mxu0
    %1083 = vmatprep.mubr.f32.mxu0 0.0
    %v1084 = vand.u32 %v616, 4294901760
    %1085 = vmatmul.mubr.f32.gmra.mrb[0].mxu0 %v1084
    %v1086 = vpop.f32.mrb[0].mxu0
    %v1087 = vadd.f32 %v995, %v1086
    %v1088 = vpop.f32.mrb[0].mxu0
    %1089 = vdwg.mxu0
    %1090 = vmatprep.subr.mxu0 0.0
    %v1091 = vand.u32 %v590, 4294901760
    %1092 = vmatpush1.msra.mxu0 %v1091
    %1093 = vmatprep.subr.mxu0 0.0
    %v1094 = vand.u32 %v591, 4294901760
    %1095 = vmatpush1.msra.mxu0 %v1094
    %1096 = vmatprep.subr.mxu0 0.0
    %v1097 = vand.u32 %v592, 4294901760
    %1098 = vmatpush1.msra.mxu0 %v1097
    %1099 = vmatprep.subr.mxu0 0.0
    %1100 = vmatpush1.msra.mxu0 0.0
    %1101 = vmatprep.subr.mxu0 0.0
    %1102 = vmatpush1.msra.mxu0 0.0
    %1103 = vmatprep.subr.mxu0 0.0
    %1104 = vmatpush1.msra.mxu0 0.0
    %1105 = vmatprep.subr.mxu0 0.0
    %1106 = vmatpush1.msra.mxu0 0.0
    %1107 = vmatprep.subr.mxu0 0.0
    %1108 = vmatpush1.msra.mxu0 0.0
    %1109 = vmatprep.subr.mxu0 0.0
    %1110 = vmatpush1.msra.mxu0 0.0
    %1111 = vmatprep.subr.mxu0 0.0
    %1112 = vmatpush1.msra.mxu0 0.0
    %1113 = vmatprep.subr.mxu0 0.0
    %1114 = vmatpush1.msra.mxu0 0.0
    %1115 = vmatprep.subr.mxu0 0.0
    %1116 = vmatpush1.msra.mxu0 0.0
    %1117 = vmatprep.subr.mxu0 0.0
    %1118 = vmatpush1.msra.mxu0 0.0
    %1119 = vmatprep.subr.mxu0 0.0
    %1120 = vmatpush1.msra.mxu0 0.0
    %1121 = vmatprep.subr.mxu0 0.0
    %1122 = vmatpush1.msra.mxu0 0.0
    %1123 = vmatprep.subr.mxu0 0.0
    %1124 = vmatpush1.msra.mxu0 0.0
    %1125 = vmatprep.subr.mxu0 0.0
    %1126 = vmatpush1.msra.mxu0 0.0
    %1127 = vmatprep.subr.mxu0 0.0
    %1128 = vmatpush1.msra.mxu0 0.0
    %1129 = vmatprep.subr.mxu0 0.0
    %1130 = vmatpush1.msra.mxu0 0.0
    %1131 = vmatprep.subr.mxu0 0.0
    %1132 = vmatpush1.msra.mxu0 0.0
    %1133 = vmatprep.subr.mxu0 0.0
    %1134 = vmatpush1.msra.mxu0 0.0
    %1135 = vmatprep.subr.mxu0 0.0
    %1136 = vmatpush1.msra.mxu0 0.0
    %1137 = vmatprep.subr.mxu0 0.0
    %1138 = vmatpush1.msra.mxu0 0.0
    %1139 = vmatprep.subr.mxu0 0.0
    %1140 = vmatpush1.msra.mxu0 0.0
    %1141 = vmatprep.subr.mxu0 0.0
    %1142 = vmatpush1.msra.mxu0 0.0
    %1143 = vmatprep.subr.mxu0 0.0
    %1144 = vmatpush1.msra.mxu0 0.0
    %1145 = vmatprep.subr.mxu0 0.0
    %1146 = vmatpush1.msra.mxu0 0.0
    %1147 = vmatprep.subr.mxu0 0.0
    %1148 = vmatpush1.msra.mxu0 0.0
    %1149 = vmatprep.subr.mxu0 0.0
    %1150 = vmatpush1.msra.mxu0 0.0
    %1151 = vmatprep.subr.mxu0 0.0
    %1152 = vmatpush1.msra.mxu0 0.0
    %1153 = vmatprep.subr.mxu0 0.0
    %1154 = vmatpush1.msra.mxu0 0.0
    %1155 = vmatprep.subr.mxu0 0.0
    %1156 = vmatpush1.msra.mxu0 0.0
    %1157 = vmatprep.mubr.f32.mxu0 0.0
    %v1158 = vand.u32 %v612, 4294901760
    %1159 = vmatmul.mubr.f32.gmra.mrb[0].mxu0 %v1158
    %v1160 = vpop.f32.mrb[0].mxu0
    %v1161 = vadd.f32 %v1075, %v1160
    %v1162 = vpop.f32.mrb[0].mxu0
    %1163 = vmatprep.mubr.f32.mxu0 0.0
    %v1164 = vand.u32 %v614, 4294901760
    %1165 = vmatmul.mubr.f32.gmra.mrb[0].mxu0 %v1164
    %v1166 = vpop.f32.mrb[0].mxu0
    %v1167 = vadd.f32 %v1081, %v1166
    %v1168 = vpop.f32.mrb[0].mxu0
    %1169 = vmatprep.mubr.f32.mxu0 0.0
    %v1170 = vand.u32 %v616, 4294901760
    %1171 = vmatmul.mubr.f32.gmra.mrb[0].mxu0 %v1170
    %v1172 = vpop.f32.mrb[0].mxu0
    %v1173 = vadd.f32 %v1087, %v1172
    %v1174 = vpop.f32.mrb[0].mxu0
    %1175 = vdwg.mxu0
    %v1176 = vtanh.pop %v1161
    %v1177 = vtanh.pop %v1167
    %v1178 = vtanh.pop %v1173
    %1179 = vset.pattern.permute.xlu0 53
    %1180 = vperm.xlu0 %1179, %v12
    %v1181 = vpop.permute.xlu0 %1180
    %1183 = vset.pattern.permute.xlu0 53
    %1184 = vperm.xlu0 %1183, %v13
    %v1185 = vpop.permute.xlu0 %1184
    %1187 = vrot.lane.b32.xlu0 %v12, 96
    %v1188 = vpop.permute.xlu0 %1187
    %1189 = vrot.lane.b32.xlu0 %v13, 96
    %v1190 = vpop.permute.xlu0 %1189
    %vm1191 = vcmask 146432
    %v1192 = vsel %vm1191, %v1188, 0
    %v1194 = vsel %vm1191, %v1190, 0
    %vm1196 = vcmask 1041408
    %v1198 = vsel %vm1196, %v1178, 0
    %1200 = vmatprep.subr.mxu0 0.0
    %v1201 = vand.u32 %v1176, 4294901760
    %1202 = vmatpush1.msra.mxu0 %v1201
    %1203 = vmatprep.subr.mxu0 0.0
    %v1204 = vand.u32 %v1177, 4294901760
    %1205 = vmatpush1.msra.mxu0 %v1204
    %1206 = vmatprep.subr.mxu0 0.0
    %v1207 = vand.u32 %v1198, 4294901760
    %1208 = vmatpush1.msra.mxu0 %v1207
    %1209 = vmatprep.subr.mxu0 0.0
    %1210 = vmatpush1.msra.mxu0 0.0
    %1211 = vmatprep.subr.mxu0 0.0
    %1212 = vmatpush1.msra.mxu0 0.0
    %1213 = vmatprep.subr.mxu0 0.0
    %1214 = vmatpush1.msra.mxu0 0.0
    %1215 = vmatprep.subr.mxu0 0.0
    %1216 = vmatpush1.msra.mxu0 0.0
    %1217 = vmatprep.subr.mxu0 0.0
    %1218 = vmatpush1.msra.mxu0 0.0
    %1219 = vmatprep.subr.mxu0 0.0
    %1220 = vmatpush1.msra.mxu0 0.0
    %1221 = vmatprep.subr.mxu0 0.0
    %1222 = vmatpush1.msra.mxu0 0.0
    %1223 = vmatprep.subr.mxu0 0.0
    %1224 = vmatpush1.msra.mxu0 0.0
    %1225 = vmatprep.subr.mxu0 0.0
    %1226 = vmatpush1.msra.mxu0 0.0
    %1227 = vmatprep.subr.mxu0 0.0
    %1228 = vmatpush1.msra.mxu0 0.0
    %1229 = vmatprep.subr.mxu0 0.0
    %1230 = vmatpush1.msra.mxu0 0.0
    %1231 = vmatprep.subr.mxu0 0.0
    %1232 = vmatpush1.msra.mxu0 0.0
    %1233 = vmatprep.subr.mxu0 0.0
    %1234 = vmatpush1.msra.mxu0 0.0
    %1235 = vmatprep.subr.mxu0 0.0
    %1236 = vmatpush1.msra.mxu0 0.0
    %1237 = vmatprep.subr.mxu0 0.0
    %1238 = vmatpush1.msra.mxu0 0.0
    %1239 = vmatprep.subr.mxu0 0.0
    %1240 = vmatpush1.msra.mxu0 0.0
    %1241 = vmatprep.subr.mxu0 0.0
    %1242 = vmatpush1.msra.mxu0 0.0
    %1243 = vmatprep.subr.mxu0 0.0
    %1244 = vmatpush1.msra.mxu0 0.0
    %1245 = vmatprep.subr.mxu0 0.0
    %1246 = vmatpush1.msra.mxu0 0.0
    %1247 = vmatprep.subr.mxu0 0.0
    %1248 = vmatpush1.msra.mxu0 0.0
    %1249 = vmatprep.subr.mxu0 0.0
    %1250 = vmatpush1.msra.mxu0 0.0
    %1251 = vmatprep.subr.mxu0 0.0
    %1252 = vmatpush1.msra.mxu0 0.0
    %1253 = vmatprep.subr.mxu0 0.0
    %1254 = vmatpush1.msra.mxu0 0.0
    %1255 = vmatprep.subr.mxu0 0.0
    %1256 = vmatpush1.msra.mxu0 0.0
    %1257 = vmatprep.subr.mxu0 0.0
    %1258 = vmatpush1.msra.mxu0 0.0
    %1259 = vmatprep.subr.mxu0 0.0
    %1260 = vmatpush1.msra.mxu0 0.0
    %1261 = vmatprep.subr.mxu0 0.0
    %1262 = vmatpush1.msra.mxu0 0.0
    %1263 = vmatprep.subr.mxu0 0.0
    %1264 = vmatpush1.msra.mxu0 0.0
    %1265 = vmatprep.subr.mxu0 0.0
    %1266 = vmatpush1.msra.mxu0 0.0
    %1267 = vmatprep.mubr.f32.mxu0 0.0
    %v1268 = vand.u32 %v1192, 4294901760
    %v1269 = vsub.f32 %v1192, %v1268
    %v1270 = vand.u32 %v1269, 4294901760
    %v1271 = vsub.f32 %v1269, %v1270
    %v1272 = vand.u32 %v1271, 4294901760
    %1273 = vmatmul.mubr.f32.gmra.mrb[0].mxu0 %v1272
    %v1274 = vpop.f32.mrb[0].mxu0
    %v1275 = vadd.f32 %v1181, %v1274
    %v1276 = vpop.f32.mrb[0].mxu0
    %1277 = vmatprep.mubr.f32.mxu0 0.0
    %v1278 = vand.u32 %v1194, 4294901760
    %v1279 = vsub.f32 %v1194, %v1278
    %v1280 = vand.u32 %v1279, 4294901760
    %v1281 = vsub.f32 %v1279, %v1280
    %v1282 = vand.u32 %v1281, 4294901760
    %1283 = vmatmul.mubr.f32.gmra.mrb[0].mxu0 %v1282
    %v1284 = vpop.f32.mrb[0].mxu0
    %v1285 = vadd.f32 %v1185, %v1284
    %v1286 = vpop.f32.mrb[0].mxu0
    %1287 = vdwg.mxu0
    %1288 = vmatprep.subr.mxu0 0.0
    %v1289 = vand.u32 %v1176, 4294901760
    %v1290 = vsub.f32 %v1176, %v1289
    %v1291 = vand.u32 %v1290, 4294901760
    %v1292 = vsub.f32 %v1290, %v1291
    %v1293 = vand.u32 %v1292, 4294901760
    %1294 = vmatpush1.msra.mxu0 %v1293
    %1295 = vmatprep.subr.mxu0 0.0
    %v1296 = vand.u32 %v1177, 4294901760
    %v1297 = vsub.f32 %v1177, %v1296
    %v1298 = vand.u32 %v1297, 4294901760
    %v1299 = vsub.f32 %v1297, %v1298
    %v1300 = vand.u32 %v1299, 4294901760
    %1301 = vmatpush1.msra.mxu0 %v1300
    %1302 = vmatprep.subr.mxu0 0.0
    %v1303 = vand.u32 %v1198, 4294901760
    %v1304 = vsub.f32 %v1198, %v1303
    %v1305 = vand.u32 %v1304, 4294901760
    %v1306 = vsub.f32 %v1304, %v1305
    %v1307 = vand.u32 %v1306, 4294901760
    %1308 = vmatpush1.msra.mxu0 %v1307
    %1309 = vmatprep.subr.mxu0 0.0
    %1310 = vmatpush1.msra.mxu0 0.0
    %1311 = vmatprep.subr.mxu0 0.0
    %1312 = vmatpush1.msra.mxu0 0.0
    %1313 = vmatprep.subr.mxu0 0.0
    %1314 = vmatpush1.msra.mxu0 0.0
    %1315 = vmatprep.subr.mxu0 0.0
    %1316 = vmatpush1.msra.mxu0 0.0
    %1317 = vmatprep.subr.mxu0 0.0
    %1318 = vmatpush1.msra.mxu0 0.0
    %1319 = vmatprep.subr.mxu0 0.0
    %1320 = vmatpush1.msra.mxu0 0.0
    %1321 = vmatprep.subr.mxu0 0.0
    %1322 = vmatpush1.msra.mxu0 0.0
    %1323 = vmatprep.subr.mxu0 0.0
    %1324 = vmatpush1.msra.mxu0 0.0
    %1325 = vmatprep.subr.mxu0 0.0
    %1326 = vmatpush1.msra.mxu0 0.0
    %1327 = vmatprep.subr.mxu0 0.0
    %1328 = vmatpush1.msra.mxu0 0.0
    %1329 = vmatprep.subr.mxu0 0.0
    %1330 = vmatpush1.msra.mxu0 0.0
    %1331 = vmatprep.subr.mxu0 0.0
    %1332 = vmatpush1.msra.mxu0 0.0
    %1333 = vmatprep.subr.mxu0 0.0
    %1334 = vmatpush1.msra.mxu0 0.0
    %1335 = vmatprep.subr.mxu0 0.0
    %1336 = vmatpush1.msra.mxu0 0.0
    %1337 = vmatprep.subr.mxu0 0.0
    %1338 = vmatpush1.msra.mxu0 0.0
    %1339 = vmatprep.subr.mxu0 0.0
    %1340 = vmatpush1.msra.mxu0 0.0
    %1341 = vmatprep.subr.mxu0 0.0
    %1342 = vmatpush1.msra.mxu0 0.0
    %1343 = vmatprep.subr.mxu0 0.0
    %1344 = vmatpush1.msra.mxu0 0.0
    %1345 = vmatprep.subr.mxu0 0.0
    %1346 = vmatpush1.msra.mxu0 0.0
    %1347 = vmatprep.subr.mxu0 0.0
    %1348 = vmatpush1.msra.mxu0 0.0
    %1349 = vmatprep.subr.mxu0 0.0
    %1350 = vmatpush1.msra.mxu0 0.0
    %1351 = vmatprep.subr.mxu0 0.0
    %1352 = vmatpush1.msra.mxu0 0.0
    %1353 = vmatprep.subr.mxu0 0.0
    %1354 = vmatpush1.msra.mxu0 0.0
    %1355 = vmatprep.subr.mxu0 0.0
    %1356 = vmatpush1.msra.mxu0 0.0
    %1357 = vmatprep.subr.mxu0 0.0
    %1358 = vmatpush1.msra.mxu0 0.0
    %1359 = vmatprep.subr.mxu0 0.0
    %1360 = vmatpush1.msra.mxu0 0.0
    %1361 = vmatprep.subr.mxu0 0.0
    %1362 = vmatpush1.msra.mxu0 0.0
    %1363 = vmatprep.subr.mxu0 0.0
    %1364 = vmatpush1.msra.mxu0 0.0
    %1365 = vmatprep.subr.mxu0 0.0
    %1366 = vmatpush1.msra.mxu0 0.0
    %1367 = vmatprep.mubr.f32.mxu0 0.0
    %v1368 = vand.u32 %v1192, 4294901760
    %1369 = vmatmul.mubr.f32.gmra.mrb[0].mxu0 %v1368
    %v1370 = vpop.f32.mrb[0].mxu0
    %v1371 = vadd.f32 %v1275, %v1370
    %v1372 = vpop.f32.mrb[0].mxu0
    %1373 = vmatprep.mubr.f32.mxu0 0.0
    %v1374 = vand.u32 %v1194, 4294901760
    %1375 = vmatmul.mubr.f32.gmra.mrb[0].mxu0 %v1374
    %v1376 = vpop.f32.mrb[0].mxu0
    %v1377 = vadd.f32 %v1285, %v1376
    %v1378 = vpop.f32.mrb[0].mxu0
    %1379 = vdwg.mxu0
    %1380 = vmatprep.subr.mxu0 0.0
    %v1381 = vand.u32 %v1176, 4294901760
    %v1382 = vsub.f32 %v1176, %v1381
    %1383 = vmatpush1.msra.mxu0 %v1382
    %1384 = vmatprep.subr.mxu0 0.0
    %v1385 = vand.u32 %v1177, 4294901760
    %v1386 = vsub.f32 %v1177, %v1385
    %1387 = vmatpush1.msra.mxu0 %v1386
    %1388 = vmatprep.subr.mxu0 0.0
    %v1389 = vand.u32 %v1198, 4294901760
    %v1390 = vsub.f32 %v1198, %v1389
    %1391 = vmatpush1.msra.mxu0 %v1390
    %1392 = vmatprep.subr.mxu0 0.0
    %1393 = vmatpush1.msra.mxu0 0.0
    %1394 = vmatprep.subr.mxu0 0.0
    %1395 = vmatpush1.msra.mxu0 0.0
    %1396 = vmatprep.subr.mxu0 0.0
    %1397 = vmatpush1.msra.mxu0 0.0
    %1398 = vmatprep.subr.mxu0 0.0
    %1399 = vmatpush1.msra.mxu0 0.0
    %1400 = vmatprep.subr.mxu0 0.0
    %1401 = vmatpush1.msra.mxu0 0.0
    %1402 = vmatprep.subr.mxu0 0.0
    %1403 = vmatpush1.msra.mxu0 0.0
    %1404 = vmatprep.subr.mxu0 0.0
    %1405 = vmatpush1.msra.mxu0 0.0
    %1406 = vmatprep.subr.mxu0 0.0
    %1407 = vmatpush1.msra.mxu0 0.0
    %1408 = vmatprep.subr.mxu0 0.0
    %1409 = vmatpush1.msra.mxu0 0.0
    %1410 = vmatprep.subr.mxu0 0.0
    %1411 = vmatpush1.msra.mxu0 0.0
    %1412 = vmatprep.subr.mxu0 0.0
    %1413 = vmatpush1.msra.mxu0 0.0
    %1414 = vmatprep.subr.mxu0 0.0
    %1415 = vmatpush1.msra.mxu0 0.0
    %1416 = vmatprep.subr.mxu0 0.0
    %1417 = vmatpush1.msra.mxu0 0.0
    %1418 = vmatprep.subr.mxu0 0.0
    %1419 = vmatpush1.msra.mxu0 0.0
    %1420 = vmatprep.subr.mxu0 0.0
    %1421 = vmatpush1.msra.mxu0 0.0
    %1422 = vmatprep.subr.mxu0 0.0
    %1423 = vmatpush1.msra.mxu0 0.0
    %1424 = vmatprep.subr.mxu0 0.0
    %1425 = vmatpush1.msra.mxu0 0.0
    %1426 = vmatprep.subr.mxu0 0.0
    %1427 = vmatpush1.msra.mxu0 0.0
    %1428 = vmatprep.subr.mxu0 0.0
    %1429 = vmatpush1.msra.mxu0 0.0
    %1430 = vmatprep.subr.mxu0 0.0
    %1431 = vmatpush1.msra.mxu0 0.0
    %1432 = vmatprep.subr.mxu0 0.0
    %1433 = vmatpush1.msra.mxu0 0.0
    %1434 = vmatprep.subr.mxu0 0.0
    %1435 = vmatpush1.msra.mxu0 0.0
    %1436 = vmatprep.subr.mxu0 0.0
    %1437 = vmatpush1.msra.mxu0 0.0
    %1438 = vmatprep.subr.mxu0 0.0
    %1439 = vmatpush1.msra.mxu0 0.0
    %1440 = vmatprep.subr.mxu0 0.0
    %1441 = vmatpush1.msra.mxu0 0.0
    %1442 = vmatprep.subr.mxu0 0.0
    %1443 = vmatpush1.msra.mxu0 0.0
    %1444 = vmatprep.subr.mxu0 0.0
    %1445 = vmatpush1.msra.mxu0 0.0
    %1446 = vmatprep.subr.mxu0 0.0
    %1447 = vmatpush1.msra.mxu0 0.0
    %1448 = vmatprep.subr.mxu0 0.0
    %1449 = vmatpush1.msra.mxu0 0.0
    %1450 = vmatprep.mubr.f32.mxu0 0.0
    %v1451 = vand.u32 %v1192, 4294901760
    %v1452 = vsub.f32 %v1192, %v1451
    %1453 = vmatmul.mubr.f32.gmra.mrb[0].mxu0 %v1452
    %v1454 = vpop.f32.mrb[0].mxu0
    %v1455 = vadd.f32 %v1371, %v1454
    %v1456 = vpop.f32.mrb[0].mxu0
    %1457 = vmatprep.mubr.f32.mxu0 0.0
    %v1458 = vand.u32 %v1194, 4294901760
    %v1459 = vsub.f32 %v1194, %v1458
    %1460 = vmatmul.mubr.f32.gmra.mrb[0].mxu0 %v1459
    %v1461 = vpop.f32.mrb[0].mxu0
    %v1462 = vadd.f32 %v1377, %v1461
    %v1463 = vpop.f32.mrb[0].mxu0
    %1464 = vdwg.mxu0
    %1465 = vmatprep.subr.mxu0 0.0
    %v1466 = vand.u32 %v1176, 4294901760
    %1467 = vmatpush1.msra.mxu0 %v1466
    %1468 = vmatprep.subr.mxu0 0.0
    %v1469 = vand.u32 %v1177, 4294901760
    %1470 = vmatpush1.msra.mxu0 %v1469
    %1471 = vmatprep.subr.mxu0 0.0
    %v1472 = vand.u32 %v1198, 4294901760
    %1473 = vmatpush1.msra.mxu0 %v1472
    %1474 = vmatprep.subr.mxu0 0.0
    %1475 = vmatpush1.msra.mxu0 0.0
    %1476 = vmatprep.subr.mxu0 0.0
    %1477 = vmatpush1.msra.mxu0 0.0
    %1478 = vmatprep.subr.mxu0 0.0
    %1479 = vmatpush1.msra.mxu0 0.0
    %1480 = vmatprep.subr.mxu0 0.0
    %1481 = vmatpush1.msra.mxu0 0.0
    %1482 = vmatprep.subr.mxu0 0.0
    %1483 = vmatpush1.msra.mxu0 0.0
    %1484 = vmatprep.subr.mxu0 0.0
    %1485 = vmatpush1.msra.mxu0 0.0
    %1486 = vmatprep.subr.mxu0 0.0
    %1487 = vmatpush1.msra.mxu0 0.0
    %1488 = vmatprep.subr.mxu0 0.0
    %1489 = vmatpush1.msra.mxu0 0.0
    %1490 = vmatprep.subr.mxu0 0.0
    %1491 = vmatpush1.msra.mxu0 0.0
    %1492 = vmatprep.subr.mxu0 0.0
    %1493 = vmatpush1.msra.mxu0 0.0
    %1494 = vmatprep.subr.mxu0 0.0
    %1495 = vmatpush1.msra.mxu0 0.0
    %1496 = vmatprep.subr.mxu0 0.0
    %1497 = vmatpush1.msra.mxu0 0.0
    %1498 = vmatprep.subr.mxu0 0.0
    %1499 = vmatpush1.msra.mxu0 0.0
    %1500 = vmatprep.subr.mxu0 0.0
    %1501 = vmatpush1.msra.mxu0 0.0
    %1502 = vmatprep.subr.mxu0 0.0
    %1503 = vmatpush1.msra.mxu0 0.0
    %1504 = vmatprep.subr.mxu0 0.0
    %1505 = vmatpush1.msra.mxu0 0.0
    %1506 = vmatprep.subr.mxu0 0.0
    %1507 = vmatpush1.msra.mxu0 0.0
    %1508 = vmatprep.subr.mxu0 0.0
    %1509 = vmatpush1.msra.mxu0 0.0
    %1510 = vmatprep.subr.mxu0 0.0
    %1511 = vmatpush1.msra.mxu0 0.0
    %1512 = vmatprep.subr.mxu0 0.0
    %1513 = vmatpush1.msra.mxu0 0.0
    %1514 = vmatprep.subr.mxu0 0.0
    %1515 = vmatpush1.msra.mxu0 0.0
    %1516 = vmatprep.subr.mxu0 0.0
    %1517 = vmatpush1.msra.mxu0 0.0
    %1518 = vmatprep.subr.mxu0 0.0
    %1519 = vmatpush1.msra.mxu0 0.0
    %1520 = vmatprep.subr.mxu0 0.0
    %1521 = vmatpush1.msra.mxu0 0.0
    %1522 = vmatprep.subr.mxu0 0.0
    %1523 = vmatpush1.msra.mxu0 0.0
    %1524 = vmatprep.subr.mxu0 0.0
    %1525 = vmatpush1.msra.mxu0 0.0
    %1526 = vmatprep.subr.mxu0 0.0
    %1527 = vmatpush1.msra.mxu0 0.0
    %1528 = vmatprep.subr.mxu0 0.0
    %1529 = vmatpush1.msra.mxu0 0.0
    %1530 = vmatprep.subr.mxu0 0.0
    %1531 = vmatpush1.msra.mxu0 0.0
    %1532 = vmatprep.mubr.f32.mxu0 0.0
    %v1533 = vand.u32 %v1192, 4294901760
    %v1534 = vsub.f32 %v1192, %v1533
    %v1535 = vand.u32 %v1534, 4294901760
    %1536 = vmatmul.mubr.f32.gmra.mrb[0].mxu0 %v1535
    %v1537 = vpop.f32.mrb[0].mxu0
    %v1538 = vadd.f32 %v1455, %v1537
    %v1539 = vpop.f32.mrb[0].mxu0
    %1540 = vmatprep.mubr.f32.mxu0 0.0
    %v1541 = vand.u32 %v1194, 4294901760
    %v1542 = vsub.f32 %v1194, %v1541
    %v1543 = vand.u32 %v1542, 4294901760
    %1544 = vmatmul.mubr.f32.gmra.mrb[0].mxu0 %v1543
    %v1545 = vpop.f32.mrb[0].mxu0
    %v1546 = vadd.f32 %v1462, %v1545
    %v1547 = vpop.f32.mrb[0].mxu0
    %1548 = vdwg.mxu0
    %1549 = vmatprep.subr.mxu0 0.0
    %v1550 = vand.u32 %v1176, 4294901760
    %v1551 = vsub.f32 %v1176, %v1550
    %v1552 = vand.u32 %v1551, 4294901760
    %1553 = vmatpush1.msra.mxu0 %v1552
    %1554 = vmatprep.subr.mxu0 0.0
    %v1555 = vand.u32 %v1177, 4294901760
    %v1556 = vsub.f32 %v1177, %v1555
    %v1557 = vand.u32 %v1556, 4294901760
    %1558 = vmatpush1.msra.mxu0 %v1557
    %1559 = vmatprep.subr.mxu0 0.0
    %v1560 = vand.u32 %v1198, 4294901760
    %v1561 = vsub.f32 %v1198, %v1560
    %v1562 = vand.u32 %v1561, 4294901760
    %1563 = vmatpush1.msra.mxu0 %v1562
    %1564 = vmatprep.subr.mxu0 0.0
    %1565 = vmatpush1.msra.mxu0 0.0
    %1566 = vmatprep.subr.mxu0 0.0
    %1567 = vmatpush1.msra.mxu0 0.0
    %1568 = vmatprep.subr.mxu0 0.0
    %1569 = vmatpush1.msra.mxu0 0.0
    %1570 = vmatprep.subr.mxu0 0.0
    %1571 = vmatpush1.msra.mxu0 0.0
    %1572 = vmatprep.subr.mxu0 0.0
    %1573 = vmatpush1.msra.mxu0 0.0
    %1574 = vmatprep.subr.mxu0 0.0
    %1575 = vmatpush1.msra.mxu0 0.0
    %1576 = vmatprep.subr.mxu0 0.0
    %1577 = vmatpush1.msra.mxu0 0.0
    %1578 = vmatprep.subr.mxu0 0.0
    %1579 = vmatpush1.msra.mxu0 0.0
    %1580 = vmatprep.subr.mxu0 0.0
    %1581 = vmatpush1.msra.mxu0 0.0
    %1582 = vmatprep.subr.mxu0 0.0
    %1583 = vmatpush1.msra.mxu0 0.0
    %1584 = vmatprep.subr.mxu0 0.0
    %1585 = vmatpush1.msra.mxu0 0.0
    %1586 = vmatprep.subr.mxu0 0.0
    %1587 = vmatpush1.msra.mxu0 0.0
    %1588 = vmatprep.subr.mxu0 0.0
    %1589 = vmatpush1.msra.mxu0 0.0
    %1590 = vmatprep.subr.mxu0 0.0
    %1591 = vmatpush1.msra.mxu0 0.0
    %1592 = vmatprep.subr.mxu0 0.0
    %1593 = vmatpush1.msra.mxu0 0.0
    %1594 = vmatprep.subr.mxu0 0.0
    %1595 = vmatpush1.msra.mxu0 0.0
    %1596 = vmatprep.subr.mxu0 0.0
    %1597 = vmatpush1.msra.mxu0 0.0
    %1598 = vmatprep.subr.mxu0 0.0
    %1599 = vmatpush1.msra.mxu0 0.0
    %1600 = vmatprep.subr.mxu0 0.0
    %1601 = vmatpush1.msra.mxu0 0.0
    %1602 = vmatprep.subr.mxu0 0.0
    %1603 = vmatpush1.msra.mxu0 0.0
    %1604 = vmatprep.subr.mxu0 0.0
    %1605 = vmatpush1.msra.mxu0 0.0
    %1606 = vmatprep.subr.mxu0 0.0
    %1607 = vmatpush1.msra.mxu0 0.0
    %1608 = vmatprep.subr.mxu0 0.0
    %1609 = vmatpush1.msra.mxu0 0.0
    %1610 = vmatprep.subr.mxu0 0.0
    %1611 = vmatpush1.msra.mxu0 0.0
    %1612 = vmatprep.subr.mxu0 0.0
    %1613 = vmatpush1.msra.mxu0 0.0
    %1614 = vmatprep.subr.mxu0 0.0
    %1615 = vmatpush1.msra.mxu0 0.0
    %1616 = vmatprep.subr.mxu0 0.0
    %1617 = vmatpush1.msra.mxu0 0.0
    %1618 = vmatprep.subr.mxu0 0.0
    %1619 = vmatpush1.msra.mxu0 0.0
    %1620 = vmatprep.subr.mxu0 0.0
    %1621 = vmatpush1.msra.mxu0 0.0
    %1622 = vmatprep.mubr.f32.mxu0 0.0
    %v1623 = vand.u32 %v1192, 4294901760
    %1624 = vmatmul.mubr.f32.gmra.mrb[0].mxu0 %v1623
    %v1625 = vpop.f32.mrb[0].mxu0
    %v1626 = vadd.f32 %v1538, %v1625
    %v1627 = vpop.f32.mrb[0].mxu0
    %1628 = vmatprep.mubr.f32.mxu0 0.0
    %v1629 = vand.u32 %v1194, 4294901760
    %1630 = vmatmul.mubr.f32.gmra.mrb[0].mxu0 %v1629
    %v1631 = vpop.f32.mrb[0].mxu0
    %v1632 = vadd.f32 %v1546, %v1631
    %v1633 = vpop.f32.mrb[0].mxu0
    %1634 = vdwg.mxu0
    %1635 = vmatprep.subr.mxu0 0.0
    %v1636 = vand.u32 %v1176, 4294901760
    %1637 = vmatpush1.msra.mxu0 %v1636
    %1638 = vmatprep.subr.mxu0 0.0
    %v1639 = vand.u32 %v1177, 4294901760
    %1640 = vmatpush1.msra.mxu0 %v1639
    %1641 = vmatprep.subr.mxu0 0.0
    %v1642 = vand.u32 %v1198, 4294901760
    %1643 = vmatpush1.msra.mxu0 %v1642
    %1644 = vmatprep.subr.mxu0 0.0
    %1645 = vmatpush1.msra.mxu0 0.0
    %1646 = vmatprep.subr.mxu0 0.0
    %1647 = vmatpush1.msra.mxu0 0.0
    %1648 = vmatprep.subr.mxu0 0.0
    %1649 = vmatpush1.msra.mxu0 0.0
    %1650 = vmatprep.subr.mxu0 0.0
    %1651 = vmatpush1.msra.mxu0 0.0
    %1652 = vmatprep.subr.mxu0 0.0
    %1653 = vmatpush1.msra.mxu0 0.0
    %1654 = vmatprep.subr.mxu0 0.0
    %1655 = vmatpush1.msra.mxu0 0.0
    %1656 = vmatprep.subr.mxu0 0.0
    %1657 = vmatpush1.msra.mxu0 0.0
    %1658 = vmatprep.subr.mxu0 0.0
    %1659 = vmatpush1.msra.mxu0 0.0
    %1660 = vmatprep.subr.mxu0 0.0
    %1661 = vmatpush1.msra.mxu0 0.0
    %1662 = vmatprep.subr.mxu0 0.0
    %1663 = vmatpush1.msra.mxu0 0.0
    %1664 = vmatprep.subr.mxu0 0.0
    %1665 = vmatpush1.msra.mxu0 0.0
    %1666 = vmatprep.subr.mxu0 0.0
    %1667 = vmatpush1.msra.mxu0 0.0
    %1668 = vmatprep.subr.mxu0 0.0
    %1669 = vmatpush1.msra.mxu0 0.0
    %1670 = vmatprep.subr.mxu0 0.0
    %1671 = vmatpush1.msra.mxu0 0.0
    %1672 = vmatprep.subr.mxu0 0.0
    %1673 = vmatpush1.msra.mxu0 0.0
    %1674 = vmatprep.subr.mxu0 0.0
    %1675 = vmatpush1.msra.mxu0 0.0
    %1676 = vmatprep.subr.mxu0 0.0
    %1677 = vmatpush1.msra.mxu0 0.0
    %1678 = vmatprep.subr.mxu0 0.0
    %1679 = vmatpush1.msra.mxu0 0.0
    %1680 = vmatprep.subr.mxu0 0.0
    %1681 = vmatpush1.msra.mxu0 0.0
    %1682 = vmatprep.subr.mxu0 0.0
    %1683 = vmatpush1.msra.mxu0 0.0
    %1684 = vmatprep.subr.mxu0 0.0
    %1685 = vmatpush1.msra.mxu0 0.0
    %1686 = vmatprep.subr.mxu0 0.0
    %1687 = vmatpush1.msra.mxu0 0.0
    %1688 = vmatprep.subr.mxu0 0.0
    %1689 = vmatpush1.msra.mxu0 0.0
    %1690 = vmatprep.subr.mxu0 0.0
    %1691 = vmatpush1.msra.mxu0 0.0
    %1692 = vmatprep.subr.mxu0 0.0
    %1693 = vmatpush1.msra.mxu0 0.0
    %1694 = vmatprep.subr.mxu0 0.0
    %1695 = vmatpush1.msra.mxu0 0.0
    %1696 = vmatprep.subr.mxu0 0.0
    %1697 = vmatpush1.msra.mxu0 0.0
    %1698 = vmatprep.subr.mxu0 0.0
    %1699 = vmatpush1.msra.mxu0 0.0
    %1700 = vmatprep.subr.mxu0 0.0
    %1701 = vmatpush1.msra.mxu0 0.0
    %1702 = vmatprep.mubr.f32.mxu0 0.0
    %v1703 = vand.u32 %v1192, 4294901760
    %1704 = vmatmul.mubr.f32.gmra.mrb[0].mxu0 %v1703
    %v1705 = vpop.f32.mrb[0].mxu0
    %v1706 = vadd.f32 %v1626, %v1705
    %v1707 = vpop.f32.mrb[0].mxu0
    %1708 = vmatprep.mubr.f32.mxu0 0.0
    %v1709 = vand.u32 %v1194, 4294901760
    %1710 = vmatmul.mubr.f32.gmra.mrb[0].mxu0 %v1709
    %v1711 = vpop.f32.mrb[0].mxu0
    %v1712 = vadd.f32 %v1632, %v1711
    %v1713 = vpop.f32.mrb[0].mxu0
    %1714 = vdwg.mxu0
    %v1715 = vmax.f32 %v1706, 0.0
    %v1716 = vmax.f32 %v1712, 0.0
    %1717 = vset.pattern.permute.xlu0 50
    %1718 = vperm.xlu0 %1717, %v12
    %v1719 = vpop.permute.xlu0 %1718
    %1721 = vset.pattern.permute.xlu0 50
    %1722 = vperm.xlu0 %1721, %v13
    %v1723 = vpop.permute.xlu0 %1722
    %v1725 = vmul.f32 %v1719, %v1715
    %v1726 = vmul.f32 %v1723, %v1716
    %vm1727 = vcmask 130048
    %v1728 = vsel %vm1727, %v1725, 0.0
    %vm1729 = vcmask 125952
    %v1730 = vsel %vm1729, %v1726, 0.0
    %v1731 = vadd.f32 %v1728, %v1730
    %v1732 = vrot.slane %v1731, 4
    %v1733 = vadd.f32 %v1731, %v1732
    %v1734 = vrot.slane %v1733, 2
    %v1735 = vadd.f32 %v1733, %v1734
    %v1736 = vrot.slane %v1735, 1
    %v1737 = vadd.f32 %v1735, %v1736
    %1738 = vset.pattern.permute.xlu0 54
    %1739 = vperm.xlu0 %1738, %v12
    %v1740 = vpop.permute.xlu0 %1739
    %v1742 = vadd.f32 %v1737, %v1740
    %vm1743 = vcmask 122880
    %1744 = vst.msk [vmem:[#allocation2] sm:$0x1] %vm1743, %v1742
    // Predicated region
    $region10: #{mlp_forward.1} parent=1 // pred_check
      _
    $region11: #{mlp_forward.1} parent=1 // pred_check_branch
      %1746 = sbr.rel (0) target = $region13
    $region12: #{mlp_forward.1} parent=1 // pred_region
      %s1748 = ssub.s32 16, 16
      %1749 = vsyncadd [#allocation3], %s1748
      %s1751 = sshll.u32 [#allocation2], 4
      %s1752 = int_to_ptr.vmem [resolvable:$true] %s1751
      %1754 = dma.vmem_to_hbm [thread:$0]  %s1752, 16, %s2, [#allocation3]
    $region13: #{mlp_forward.1} parent=1 // pred_fallthru
      _
    // Predicated region
    $region14: #{mlp_forward.1} parent=1 // pred_check
      _
    $region15: #{mlp_forward.1} parent=1 // pred_check_branch
      %1756 = sbr.rel (0) target = $region17
    $region16: #{mlp_forward.1} parent=1 // pred_region
      %1757 = dma.done [#allocation3], 16
    $region17: #{mlp_forward.1} parent=1 // pred_fallthru
      _
    %1758 = vsyncpa [#allocation3], 1

</llo_original>
